<compile_context>
chip_gen: v7x
topology: tpu7x:2x2x1
jax: 0.10.0
libtpu: 0.0.40
codegen_flags: <defaults>
</compile_context>

<pallas_src>
import functools
import math

import jax
import jax.numpy as jnp
from jax import lax
from jax.experimental import pallas as pl
from jax.experimental.pallas import tpu as pltpu


# ----------------------------------------------------------------------------
# Fused Pallas kernel: one grid step == full MHA forward for one batch element
# ----------------------------------------------------------------------------
def _fused_mha_kernel(x_ref, w_in_ref, b_in_ref, w_out_ref, b_out_ref, o_ref,
                      *, num_heads, scale):
    L, E = x_ref.shape                       # (L, E) — leading batch dim squeezed
    H = num_heads
    D = E // H

    x = x_ref[...].astype(jnp.float32)       # (L, E)
    w_in = w_in_ref[...].astype(jnp.float32)   # (3E, E)  PyTorch layout (out, in)
    w_out = w_out_ref[...].astype(jnp.float32)  # (E, E)

    # Packed in-projection: qkv = x @ w_in.T + b_in  (contract second axes,
    # so no transpose is needed anywhere in the wrapper or the kernel).
    qkv = lax.dot_general(x, w_in, (((1,), (1,)), ((), ())),
                          preferred_element_type=jnp.float32)
    qkv = qkv + b_in_ref[...].astype(jnp.float32)           # (L, 3E)

    # Per-head attention; out-projection is accumulated head-by-head so the
    # head merge needs no concatenate:  out = sum_h  o_h @ W_out[:, hD:(h+1)D].T
    acc = jnp.zeros((L, E), jnp.float32)
    for h in range(H):                                       # H small -> unrolled
        qh = qkv[:, h * D:(h + 1) * D]                       # (L, D)
        kh = qkv[:, E + h * D:E + (h + 1) * D]               # (L, D)
        vh = qkv[:, 2 * E + h * D:2 * E + (h + 1) * D]       # (L, D)

        # scores = q @ k^T * scale  (full L x L is fine at these sizes)
        # TODO(synk): switch to a kv-tiled flash-style loop before L grows past ~1-2K.
        s = lax.dot_general(qh, kh, (((1,), (1,)), ((), ())),
                            preferred_element_type=jnp.float32) * scale  # (L, L)
        m = jnp.max(s, axis=-1, keepdims=True)
        p = jnp.exp(s - m)
        p = p * pl.reciprocal(jnp.sum(p, axis=-1, keepdims=True), approx=False)
        oh = jnp.dot(p, vh, preferred_element_type=jnp.float32)          # (L, D)

        acc = acc + lax.dot_general(oh, w_out[:, h * D:(h + 1) * D],
                                    (((1,), (1,)), ((), ())),
                                    preferred_element_type=jnp.float32)  # (L, E)

    out = acc + b_out_ref[...].astype(jnp.float32)
    o_ref[...] = out.astype(o_ref.dtype)


# ----------------------------------------------------------------------------
# CrossSourceFusion forward
# ----------------------------------------------------------------------------
def cross_source_fusion(embeddings, params, num_heads):
    """embeddings: list of (L_i, N, E) arrays.  Returns (sum(L_i), N, E)."""
    x = jnp.concatenate(embeddings, axis=0)          # (L, N, E)
    L, N, E = x.shape
    D = E // num_heads
    scale = 1.0 / math.sqrt(D)

    # One batch-major relayout of the (tiny) input; everything else is fused.
    xb = jnp.transpose(x, (1, 0, 2))                 # (N, L, E)
    b_in = params["in_proj_bias"].reshape(1, 3 * E)
    b_out = params["out_proj_bias"].reshape(1, E)

    kernel = functools.partial(_fused_mha_kernel, num_heads=num_heads, scale=scale)
    out = pl.pallas_call(
        kernel,
        out_shape=jax.ShapeDtypeStruct((N, L, E), x.dtype),
        grid=(N,),
        in_specs=[
            pl.BlockSpec((None, L, E), lambda n: (n, 0, 0)),   # x, per-batch block
            pl.BlockSpec((3 * E, E), lambda n: (0, 0)),        # in_proj_weight (resident)
            pl.BlockSpec((1, 3 * E), lambda n: (0, 0)),        # in_proj_bias
            pl.BlockSpec((E, E), lambda n: (0, 0)),            # out_proj_weight (resident)
            pl.BlockSpec((1, E), lambda n: (0, 0)),            # out_proj_bias
        ],
        out_specs=pl.BlockSpec((None, L, E), lambda n: (n, 0, 0)),
        compiler_params=pltpu.CompilerParams(dimension_semantics=("parallel",)),
    )(xb, params["in_proj_weight"], b_in, params["out_proj_weight"], b_out)

    return jnp.transpose(out, (1, 0, 2))             # back to (L, N, E)


# ----------------------------------------------------------------------------
# Pure-JAX reference (mirrors torch.nn.MultiheadAttention forward math)
# ----------------------------------------------------------------------------
def reference_forward(embeddings, params, num_heads):
    x = jnp.concatenate(embeddings, axis=0)
    L, N, E = x.shape
    H = num_heads
    D = E // H
    qkv = x.reshape(L * N, E) @ params["in_proj_weight"].T + params["in_proj_bias"]
    qkv = qkv.reshape(L, N, 3, H, D)
    q = qkv[:, :, 0].reshape(L, N * H, D).transpose(1, 0, 2)
    k = qkv[:, :, 1].reshape(L, N * H, D).transpose(1, 0, 2)
    v = qkv[:, :, 2].reshape(L, N * H, D).transpose(1, 0, 2)
    s = jnp.einsum("bld,bmd->blm", q, k) / jnp.sqrt(jnp.float32(D))
    p = jax.nn.softmax(s, axis=-1)
    o = jnp.einsum("blm,bmd->bld", p, v)
    o = o.transpose(1, 0, 2).reshape(L * N, E)
    out = o @ params["out_proj_weight"].T + params["out_proj_bias"]
    return out.reshape(L, N, E)


# ----------------------------------------------------------------------------
# Main
# ----------------------------------------------------------------------------
if __name__ == "__main__":
    embed_dim = 32
    num_heads = 4
    seq = 8       # per-source sequence length
    batch = 2
    n_sources = 2

    key = jax.random.PRNGKey(0)
    k_in, k_out, k_bin, k_bout, k_e0, k_e1 = jax.random.split(key, 6)

    # Deterministic synthetic parameters (shapes match nn.MultiheadAttention).
    xavier_in = math.sqrt(2.0 / (embed_dim + 3 * embed_dim))
    xavier_out = math.sqrt(2.0 / (embed_dim + embed_dim))
    params = {
        "in_proj_weight": xavier_in
        * jax.random.normal(k_in, (3 * embed_dim, embed_dim), jnp.float32),
        "in_proj_bias": 0.1
        * jax.random.normal(k_bin, (3 * embed_dim,), jnp.float32),
        "out_proj_weight": xavier_out
        * jax.random.normal(k_out, (embed_dim, embed_dim), jnp.float32),
        "out_proj_bias": 0.1
        * jax.random.normal(k_bout, (embed_dim,), jnp.float32),
    }

    # List of source embeddings, each (L_i, N, E) — concatenated along dim 0.
    embeddings = [
        jax.random.normal(k_e0, (seq, batch, embed_dim), jnp.float32),
        jax.random.normal(k_e1, (seq, batch, embed_dim), jnp.float32),
    ]

    out = cross_source_fusion(embeddings, params, num_heads)
    out = jax.block_until_ready(out)

    ref = reference_forward(embeddings, params, num_heads)
    assert out.shape == (n_sources * seq, batch, embed_dim)
    assert jnp.allclose(out, ref, atol=1e-4, rtol=1e-4)

    print("KERNEL_OK")
</pallas_src>

<mosaic_0001>
module attributes {stable_mosaic.version = 11 : i64} {
  func.func @_fused_mha_kernel(%arg0: i32, %arg1: memref<1x16x32xf32, #tpu.memory_space<vmem>>, %arg2: memref<96x32xf32, #tpu.memory_space<vmem>>, %arg3: memref<1x96xf32, #tpu.memory_space<vmem>>, %arg4: memref<32x32xf32, #tpu.memory_space<vmem>>, %arg5: memref<1x32xf32, #tpu.memory_space<vmem>>, %arg6: memref<1x16x32xf32, #tpu.memory_space<vmem>>) attributes {dimension_semantics = [#tpu.dimension_semantics<parallel>], iteration_bounds = array<i64: 2>, scalar_prefetch = 0 : i64, scratch_operands = 0 : i64, tpu.core_type = #tpu.core_type<tc>, window_params = [{transform_indices = @transform_0, window_bounds = array<i64: 1, 16, 32>}, {pipeline_mode = #tpu.pipeline_mode<synchronous>, transform_indices = @transform_1, window_bounds = array<i64: 96, 32>}, {pipeline_mode = #tpu.pipeline_mode<synchronous>, transform_indices = @transform_2, window_bounds = array<i64: 1, 96>}, {pipeline_mode = #tpu.pipeline_mode<synchronous>, transform_indices = @transform_3, window_bounds = array<i64: 32, 32>}, {pipeline_mode = #tpu.pipeline_mode<synchronous>, transform_indices = @transform_4, window_bounds = array<i64: 1, 32>}, {transform_indices = @transform_5, window_bounds = array<i64: 1, 16, 32>}]} {
    %c0 = arith.constant 0 : index
    %c0_0 = arith.constant 0 : index
    %c0_1 = arith.constant 0 : index
    %0 = vector.load %arg1[%c0, %c0_0, %c0_1] : memref<1x16x32xf32, #tpu.memory_space<vmem>>, vector<1x16x32xf32>
    %1 = vector.shape_cast %0 : vector<1x16x32xf32> to vector<16x32xf32>
    %c0_2 = arith.constant 0 : index
    %c0_3 = arith.constant 0 : index
    %2 = vector.load %arg2[%c0_2, %c0_3] : memref<96x32xf32, #tpu.memory_space<vmem>>, vector<96x32xf32>
    %c0_4 = arith.constant 0 : index
    %c0_5 = arith.constant 0 : index
    %3 = vector.load %arg4[%c0_4, %c0_5] : memref<32x32xf32, #tpu.memory_space<vmem>>, vector<32x32xf32>
    %cst = arith.constant dense<0.000000e+00> : vector<16x96xf32>
    %4 = tpu.matmul %1, %2, %cst {dimension_numbers = #tpu.dot_dimension_numbers<[1], [1], [0], [0], [0, 0, 1, 0], [], []>} : vector<16x32xf32>, vector<96x32xf32>, vector<16x96xf32> -> vector<16x96xf32>
    %c0_6 = arith.constant 0 : index
    %c0_7 = arith.constant 0 : index
    %5 = vector.load %arg3[%c0_6, %c0_7] : memref<1x96xf32, #tpu.memory_space<vmem>>, vector<1x96xf32>
    %6 = vector.broadcast %5 : vector<1x96xf32> to vector<16x96xf32>
    %7 = arith.addf %4, %6 : vector<16x96xf32>
    %cst_8 = arith.constant 0.000000e+00 : f32
    %8 = vector.broadcast %cst_8 : f32 to vector<16x32xf32>
    %9 = vector.extract_strided_slice %7 {offsets = [0, 0], sizes = [16, 8], strides = [1, 1]} : vector<16x96xf32> to vector<16x8xf32>
    %10 = vector.extract_strided_slice %7 {offsets = [0, 32], sizes = [16, 8], strides = [1, 1]} : vector<16x96xf32> to vector<16x8xf32>
    %11 = vector.extract_strided_slice %7 {offsets = [0, 64], sizes = [16, 8], strides = [1, 1]} : vector<16x96xf32> to vector<16x8xf32>
    %cst_9 = arith.constant dense<0.000000e+00> : vector<16x16xf32>
    %12 = tpu.matmul %9, %10, %cst_9 {dimension_numbers = #tpu.dot_dimension_numbers<[1], [1], [0], [0], [0, 0, 1, 0], [], []>} : vector<16x8xf32>, vector<16x8xf32>, vector<16x16xf32> -> vector<16x16xf32>
    %cst_10 = arith.constant 0.353553385 : f32
    %13 = vector.broadcast %cst_10 : f32 to vector<16x16xf32>
    %14 = arith.mulf %12, %13 : vector<16x16xf32>
    %cst_11 = arith.constant dense<0xFF800000> : vector<16xf32>
    %15 = vector.multi_reduction <maximumf>, %14, %cst_11 [1] : vector<16x16xf32> to vector<16xf32>
    %16 = vector.shape_cast %15 : vector<16xf32> to vector<16x1xf32>
    %17 = vector.broadcast %16 : vector<16x1xf32> to vector<16x16xf32>
    %18 = arith.subf %14, %17 : vector<16x16xf32>
    %19 = math.exp %18 : vector<16x16xf32>
    %cst_12 = arith.constant dense<0.000000e+00> : vector<16xf32>
    %20 = vector.multi_reduction <add>, %19, %cst_12 [1] : vector<16x16xf32> to vector<16xf32>
    %21 = vector.shape_cast %20 : vector<16xf32> to vector<16x1xf32>
    %22 = tpu.reciprocal %21 : vector<16x1xf32> -> vector<16x1xf32>
    %23 = vector.broadcast %22 : vector<16x1xf32> to vector<16x16xf32>
    %24 = arith.mulf %19, %23 : vector<16x16xf32>
    %cst_13 = arith.constant dense<0.000000e+00> : vector<16x8xf32>
    %25 = tpu.matmul %24, %11, %cst_13 {dimension_numbers = #tpu.dot_dimension_numbers<[1], [0], [0], [1], [0, 0, 1, 1], [], []>} : vector<16x16xf32>, vector<16x8xf32>, vector<16x8xf32> -> vector<16x8xf32>
    %26 = vector.extract_strided_slice %3 {offsets = [0, 0], sizes = [32, 8], strides = [1, 1]} : vector<32x32xf32> to vector<32x8xf32>
    %cst_14 = arith.constant dense<0.000000e+00> : vector<16x32xf32>
    %27 = tpu.matmul %25, %26, %cst_14 {dimension_numbers = #tpu.dot_dimension_numbers<[1], [1], [0], [0], [0, 0, 1, 0], [], []>} : vector<16x8xf32>, vector<32x8xf32>, vector<16x32xf32> -> vector<16x32xf32>
    %28 = arith.addf %8, %27 : vector<16x32xf32>
    %29 = vector.extract_strided_slice %7 {offsets = [0, 8], sizes = [16, 8], strides = [1, 1]} : vector<16x96xf32> to vector<16x8xf32>
    %30 = vector.extract_strided_slice %7 {offsets = [0, 40], sizes = [16, 8], strides = [1, 1]} : vector<16x96xf32> to vector<16x8xf32>
    %31 = vector.extract_strided_slice %7 {offsets = [0, 72], sizes = [16, 8], strides = [1, 1]} : vector<16x96xf32> to vector<16x8xf32>
    %cst_15 = arith.constant dense<0.000000e+00> : vector<16x16xf32>
    %32 = tpu.matmul %29, %30, %cst_15 {dimension_numbers = #tpu.dot_dimension_numbers<[1], [1], [0], [0], [0, 0, 1, 0], [], []>} : vector<16x8xf32>, vector<16x8xf32>, vector<16x16xf32> -> vector<16x16xf32>
    %cst_16 = arith.constant 0.353553385 : f32
    %33 = vector.broadcast %cst_16 : f32 to vector<16x16xf32>
    %34 = arith.mulf %32, %33 : vector<16x16xf32>
    %cst_17 = arith.constant dense<0xFF800000> : vector<16xf32>
    %35 = vector.multi_reduction <maximumf>, %34, %cst_17 [1] : vector<16x16xf32> to vector<16xf32>
    %36 = vector.shape_cast %35 : vector<16xf32> to vector<16x1xf32>
    %37 = vector.broadcast %36 : vector<16x1xf32> to vector<16x16xf32>
    %38 = arith.subf %34, %37 : vector<16x16xf32>
    %39 = math.exp %38 : vector<16x16xf32>
    %cst_18 = arith.constant dense<0.000000e+00> : vector<16xf32>
    %40 = vector.multi_reduction <add>, %39, %cst_18 [1] : vector<16x16xf32> to vector<16xf32>
    %41 = vector.shape_cast %40 : vector<16xf32> to vector<16x1xf32>
    %42 = tpu.reciprocal %41 : vector<16x1xf32> -> vector<16x1xf32>
    %43 = vector.broadcast %42 : vector<16x1xf32> to vector<16x16xf32>
    %44 = arith.mulf %39, %43 : vector<16x16xf32>
    %cst_19 = arith.constant dense<0.000000e+00> : vector<16x8xf32>
    %45 = tpu.matmul %44, %31, %cst_19 {dimension_numbers = #tpu.dot_dimension_numbers<[1], [0], [0], [1], [0, 0, 1, 1], [], []>} : vector<16x16xf32>, vector<16x8xf32>, vector<16x8xf32> -> vector<16x8xf32>
    %46 = vector.extract_strided_slice %3 {offsets = [0, 8], sizes = [32, 8], strides = [1, 1]} : vector<32x32xf32> to vector<32x8xf32>
    %cst_20 = arith.constant dense<0.000000e+00> : vector<16x32xf32>
    %47 = tpu.matmul %45, %46, %cst_20 {dimension_numbers = #tpu.dot_dimension_numbers<[1], [1], [0], [0], [0, 0, 1, 0], [], []>} : vector<16x8xf32>, vector<32x8xf32>, vector<16x32xf32> -> vector<16x32xf32>
    %48 = arith.addf %28, %47 : vector<16x32xf32>
    %49 = vector.extract_strided_slice %7 {offsets = [0, 16], sizes = [16, 8], strides = [1, 1]} : vector<16x96xf32> to vector<16x8xf32>
    %50 = vector.extract_strided_slice %7 {offsets = [0, 48], sizes = [16, 8], strides = [1, 1]} : vector<16x96xf32> to vector<16x8xf32>
    %51 = vector.extract_strided_slice %7 {offsets = [0, 80], sizes = [16, 8], strides = [1, 1]} : vector<16x96xf32> to vector<16x8xf32>
    %cst_21 = arith.constant dense<0.000000e+00> : vector<16x16xf32>
    %52 = tpu.matmul %49, %50, %cst_21 {dimension_numbers = #tpu.dot_dimension_numbers<[1], [1], [0], [0], [0, 0, 1, 0], [], []>} : vector<16x8xf32>, vector<16x8xf32>, vector<16x16xf32> -> vector<16x16xf32>
    %cst_22 = arith.constant 0.353553385 : f32
    %53 = vector.broadcast %cst_22 : f32 to vector<16x16xf32>
    %54 = arith.mulf %52, %53 : vector<16x16xf32>
    %cst_23 = arith.constant dense<0xFF800000> : vector<16xf32>
    %55 = vector.multi_reduction <maximumf>, %54, %cst_23 [1] : vector<16x16xf32> to vector<16xf32>
    %56 = vector.shape_cast %55 : vector<16xf32> to vector<16x1xf32>
    %57 = vector.broadcast %56 : vector<16x1xf32> to vector<16x16xf32>
    %58 = arith.subf %54, %57 : vector<16x16xf32>
    %59 = math.exp %58 : vector<16x16xf32>
    %cst_24 = arith.constant dense<0.000000e+00> : vector<16xf32>
    %60 = vector.multi_reduction <add>, %59, %cst_24 [1] : vector<16x16xf32> to vector<16xf32>
    %61 = vector.shape_cast %60 : vector<16xf32> to vector<16x1xf32>
    %62 = tpu.reciprocal %61 : vector<16x1xf32> -> vector<16x1xf32>
    %63 = vector.broadcast %62 : vector<16x1xf32> to vector<16x16xf32>
    %64 = arith.mulf %59, %63 : vector<16x16xf32>
    %cst_25 = arith.constant dense<0.000000e+00> : vector<16x8xf32>
    %65 = tpu.matmul %64, %51, %cst_25 {dimension_numbers = #tpu.dot_dimension_numbers<[1], [0], [0], [1], [0, 0, 1, 1], [], []>} : vector<16x16xf32>, vector<16x8xf32>, vector<16x8xf32> -> vector<16x8xf32>
    %66 = vector.extract_strided_slice %3 {offsets = [0, 16], sizes = [32, 8], strides = [1, 1]} : vector<32x32xf32> to vector<32x8xf32>
    %cst_26 = arith.constant dense<0.000000e+00> : vector<16x32xf32>
    %67 = tpu.matmul %65, %66, %cst_26 {dimension_numbers = #tpu.dot_dimension_numbers<[1], [1], [0], [0], [0, 0, 1, 0], [], []>} : vector<16x8xf32>, vector<32x8xf32>, vector<16x32xf32> -> vector<16x32xf32>
    %68 = arith.addf %48, %67 : vector<16x32xf32>
    %69 = vector.extract_strided_slice %7 {offsets = [0, 24], sizes = [16, 8], strides = [1, 1]} : vector<16x96xf32> to vector<16x8xf32>
    %70 = vector.extract_strided_slice %7 {offsets = [0, 56], sizes = [16, 8], strides = [1, 1]} : vector<16x96xf32> to vector<16x8xf32>
    %71 = vector.extract_strided_slice %7 {offsets = [0, 88], sizes = [16, 8], strides = [1, 1]} : vector<16x96xf32> to vector<16x8xf32>
    %cst_27 = arith.constant dense<0.000000e+00> : vector<16x16xf32>
    %72 = tpu.matmul %69, %70, %cst_27 {dimension_numbers = #tpu.dot_dimension_numbers<[1], [1], [0], [0], [0, 0, 1, 0], [], []>} : vector<16x8xf32>, vector<16x8xf32>, vector<16x16xf32> -> vector<16x16xf32>
    %cst_28 = arith.constant 0.353553385 : f32
    %73 = vector.broadcast %cst_28 : f32 to vector<16x16xf32>
    %74 = arith.mulf %72, %73 : vector<16x16xf32>
    %cst_29 = arith.constant dense<0xFF800000> : vector<16xf32>
    %75 = vector.multi_reduction <maximumf>, %74, %cst_29 [1] : vector<16x16xf32> to vector<16xf32>
    %76 = vector.shape_cast %75 : vector<16xf32> to vector<16x1xf32>
    %77 = vector.broadcast %76 : vector<16x1xf32> to vector<16x16xf32>
    %78 = arith.subf %74, %77 : vector<16x16xf32>
    %79 = math.exp %78 : vector<16x16xf32>
    %cst_30 = arith.constant dense<0.000000e+00> : vector<16xf32>
    %80 = vector.multi_reduction <add>, %79, %cst_30 [1] : vector<16x16xf32> to vector<16xf32>
    %81 = vector.shape_cast %80 : vector<16xf32> to vector<16x1xf32>
    %82 = tpu.reciprocal %81 : vector<16x1xf32> -> vector<16x1xf32>
    %83 = vector.broadcast %82 : vector<16x1xf32> to vector<16x16xf32>
    %84 = arith.mulf %79, %83 : vector<16x16xf32>
    %cst_31 = arith.constant dense<0.000000e+00> : vector<16x8xf32>
    %85 = tpu.matmul %84, %71, %cst_31 {dimension_numbers = #tpu.dot_dimension_numbers<[1], [0], [0], [1], [0, 0, 1, 1], [], []>} : vector<16x16xf32>, vector<16x8xf32>, vector<16x8xf32> -> vector<16x8xf32>
    %86 = vector.extract_strided_slice %3 {offsets = [0, 24], sizes = [32, 8], strides = [1, 1]} : vector<32x32xf32> to vector<32x8xf32>
    %cst_32 = arith.constant dense<0.000000e+00> : vector<16x32xf32>
    %87 = tpu.matmul %85, %86, %cst_32 {dimension_numbers = #tpu.dot_dimension_numbers<[1], [1], [0], [0], [0, 0, 1, 0], [], []>} : vector<16x8xf32>, vector<32x8xf32>, vector<16x32xf32> -> vector<16x32xf32>
    %88 = arith.addf %68, %87 : vector<16x32xf32>
    %c0_33 = arith.constant 0 : index
    %c0_34 = arith.constant 0 : index
    %89 = vector.load %arg5[%c0_33, %c0_34] : memref<1x32xf32, #tpu.memory_space<vmem>>, vector<1x32xf32>
    %90 = vector.broadcast %89 : vector<1x32xf32> to vector<16x32xf32>
    %91 = arith.addf %88, %90 : vector<16x32xf32>
    %c0_35 = arith.constant 0 : index
    %c0_36 = arith.constant 0 : index
    %c0_37 = arith.constant 0 : index
    %92 = vector.load %arg6[%c0_35, %c0_36, %c0_37] : memref<1x16x32xf32, #tpu.memory_space<vmem>>, vector<1x16x32xf32>
    %93 = vector.shape_cast %92 : vector<1x16x32xf32> to vector<16x32xf32>
    %94 = vector.shape_cast %91 : vector<16x32xf32> to vector<1x16x32xf32>
    tpu.vector_store %arg6[%c0_35, %c0_36, %c0_37], %94 {strides = array<i32>} : memref<1x16x32xf32, #tpu.memory_space<vmem>>, vector<1x16x32xf32>,
    return
  }
  func.func @transform_0(%arg0: i32) -> (i32, i32, i32) {
    %c0_i32 = arith.constant 0 : i32
    %c0_i32_0 = arith.constant 0 : i32
    %c0_i32_1 = arith.constant 0 : i32
    return %arg0, %c0_i32, %c0_i32_0 : i32, i32, i32
  }
  func.func @transform_1(%arg0: i32) -> (i32, i32) {
    %c0_i32 = arith.constant 0 : i32
    %c0_i32_0 = arith.constant 0 : i32
    %c0_i32_1 = arith.constant 0 : i32
    return %c0_i32, %c0_i32_0 : i32, i32
  }
  func.func @transform_2(%arg0: i32) -> (i32, i32) {
    %c0_i32 = arith.constant 0 : i32
    %c0_i32_0 = arith.constant 0 : i32
    %c0_i32_1 = arith.constant 0 : i32
    return %c0_i32, %c0_i32_0 : i32, i32
  }
  func.func @transform_3(%arg0: i32) -> (i32, i32) {
    %c0_i32 = arith.constant 0 : i32
    %c0_i32_0 = arith.constant 0 : i32
    %c0_i32_1 = arith.constant 0 : i32
    return %c0_i32, %c0_i32_0 : i32, i32
  }
  func.func @transform_4(%arg0: i32) -> (i32, i32) {
    %c0_i32 = arith.constant 0 : i32
    %c0_i32_0 = arith.constant 0 : i32
    %c0_i32_1 = arith.constant 0 : i32
    return %c0_i32, %c0_i32_0 : i32, i32
  }
  func.func @transform_5(%arg0: i32) -> (i32, i32, i32) {
    %c0_i32 = arith.constant 0 : i32
    %c0_i32_0 = arith.constant 0 : i32
    %c0_i32_1 = arith.constant 0 : i32
    return %arg0, %c0_i32, %c0_i32_0 : i32, i32, i32
  }
}

</mosaic_0001>

<llo_original>
// kernel: tpu_custom_call.1
$region0: #{tpu_custom_call.1}
  #allocation0 [shape = 'u32[]', space=smem, size = 0x4, offset = 0x4, fixed_abs, tag = 'smem constant byte address 0x4 - core index']
  #allocation1 [shape = 'u32[144,128]{1,0:T(1,128)}', space=vmem, size = 0x12000, scoped, tag = 'internal scratch']
  %s0 = inlined_call_operand.vmem [shape: f32[2,16,32], index: 0, kind: input, shape index: {}]
  %s1 = inlined_call_operand.vmem [shape: f32[96,32], index: 1, kind: input, shape index: {}]
  %s2 = inlined_call_operand.vmem [shape: f32[1,96], index: 2, kind: input, shape index: {}]
  %s3 = inlined_call_operand.vmem [shape: f32[32,32], index: 3, kind: input, shape index: {}]
  %s4 = inlined_call_operand.vmem [shape: f32[1,32], index: 4, kind: input, shape index: {}]
  %s5 = inlined_call_operand.hbm [shape: f32[2,16,32], index: 5, kind: output, shape index: {}]
  %s6 = sld [smem:[#allocation0]]
  $region53: #{tpu_custom_call.1} parent=0
    _
  %s8 = ssub.s32 1, %s6
  %s9 = scalar_select 0, %s8, %s6
  $region1: #{tpu_custom_call.1} parent=0
    #allocation2 [shape = 'u8[16384]{0}', space=vmem, size = 0x4000, scoped, tag = 'output window, operand 0']
    #allocation3 [shape = 's32[2]{0}', space=sflag, size = 0x8, scoped, tag = 'scoped memory for tpu_custom_call.1']
    %10 = vsyncpa [#allocation3], 0
    %s11 = scalar_lea.sflag [#allocation3], 1
    %12 = vsyncpa %s11, 0
    loop: start=0, step=1, limit=4
    $region2: #{tpu_custom_call.1} parent=1 // loop_pre_header
      _
    $region3: #{tpu_custom_call.1} parent=1 // loop_header
      %s14 = sphi 0, %s18
      %p15 = scmp.ge.s32.totalorder %s14, 4
      %s24 = sphi 0, %s26
      %s27 = sphi 0, %s24
      %s28 = sphi 0, %s27
      %s44 = sphi 0, %s28
      %s48 = sphi 0, %s48
      %s50 = sphi 0, %s48
      %s51 = sphi 0, %s50
      %s65 = sphi 0, %s51
      %s69 = sphi 0, %s69
      %s71 = sphi 0, %s69
      %s72 = sphi 0, %s71
      %s86 = sphi 0, %s72
      %s90 = sphi 0, %s90
      %s92 = sphi 0, %s90
      %s93 = sphi 0, %s92
      %s107 = sphi 0, %s93
      %s111 = sphi 0, %s111
      %s113 = sphi 0, %s111
      %s114 = sphi 0, %s113
      %s128 = sphi 0, %s114
      %s134 = sphi 0, %s136
      %s137 = sphi 0, %s134
      %s138 = sphi 0, %s137
      %s154 = sphi 0, %s138
    $region4: #{tpu_custom_call.1} parent=1 // loop_header_branch
      %17 = sbr.rel (%p15) target = $region8
    $region5: #{tpu_custom_call.1} parent=1 // loop_body
      %s19 = ssub.s32 %s14, 1
      %s20 = ssub.s32 %s14, 2
      %s21 = sadd.s32 %s14, 1
      %s22 = ssub.s32 %s14, %s21
      %p23 = scmp.eq.s32.totalorder %s22, 0
      %s25 = sadd.s32 %s24, 1
      %s26 = scalar_select %p23, %s24, %s25
      %p29 = pneg %p23
      %p30 = scmp.eq.s32.totalorder %s14, 1
      %p31 = por %p29, %p30
      %p32 = scmp.ne.s32.totalorder %s24, %s27
      %p33 = scmp.eq.s32.totalorder %s14, 0
      %p34 = por %p32, %p33
      %p35 = scmp.ne.s32.totalorder %s24, %s27
      %p36 = scmp.eq.s32.totalorder %s19, 1
      %p37 = por %p35, %p36
      %p38 = scmp.ne.s32.totalorder %s27, %s28
      %p39 = scmp.eq.s32.totalorder %s19, 0
      %p40 = por %p38, %p39
      %p41 = scmp.ne.s32.totalorder %s27, %s28
      %p42 = scmp.eq.s32.totalorder %s20, 1
      %p43 = por %p41, %p42
      %p45 = scmp.ne.s32.totalorder %s28, %s44
      %p46 = scmp.eq.s32.totalorder %s20, 0
      %p47 = por %p45, %p46
      %s49 = sadd.s32 %s48, 1
      %p52 = scmp.eq.s32.totalorder %s14, 1
      %p53 = scmp.ne.s32.totalorder %s48, %s50
      %p54 = scmp.eq.s32.totalorder %s14, 0
      %p55 = por %p53, %p54
      %p56 = scmp.ne.s32.totalorder %s48, %s50
      %p57 = scmp.eq.s32.totalorder %s19, 1
      %p58 = por %p56, %p57
      %p59 = scmp.ne.s32.totalorder %s50, %s51
      %p60 = scmp.eq.s32.totalorder %s19, 0
      %p61 = por %p59, %p60
      %p62 = scmp.ne.s32.totalorder %s50, %s51
      %p63 = scmp.eq.s32.totalorder %s20, 1
      %p64 = por %p62, %p63
      %p66 = scmp.ne.s32.totalorder %s51, %s65
      %p67 = scmp.eq.s32.totalorder %s20, 0
      %p68 = por %p66, %p67
      %s70 = sadd.s32 %s69, 1
      %p73 = scmp.eq.s32.totalorder %s14, 1
      %p74 = scmp.ne.s32.totalorder %s69, %s71
      %p75 = scmp.eq.s32.totalorder %s14, 0
      %p76 = por %p74, %p75
      %p77 = scmp.ne.s32.totalorder %s69, %s71
      %p78 = scmp.eq.s32.totalorder %s19, 1
      %p79 = por %p77, %p78
      %p80 = scmp.ne.s32.totalorder %s71, %s72
      %p81 = scmp.eq.s32.totalorder %s19, 0
      %p82 = por %p80, %p81
      %p83 = scmp.ne.s32.totalorder %s71, %s72
      %p84 = scmp.eq.s32.totalorder %s20, 1
      %p85 = por %p83, %p84
      %p87 = scmp.ne.s32.totalorder %s72, %s86
      %p88 = scmp.eq.s32.totalorder %s20, 0
      %p89 = por %p87, %p88
      %s91 = sadd.s32 %s90, 1
      %p94 = scmp.eq.s32.totalorder %s14, 1
      %p95 = scmp.ne.s32.totalorder %s90, %s92
      %p96 = scmp.eq.s32.totalorder %s14, 0
      %p97 = por %p95, %p96
      %p98 = scmp.ne.s32.totalorder %s90, %s92
      %p99 = scmp.eq.s32.totalorder %s19, 1
      %p100 = por %p98, %p99
      %p101 = scmp.ne.s32.totalorder %s92, %s93
      %p102 = scmp.eq.s32.totalorder %s19, 0
      %p103 = por %p101, %p102
      %p104 = scmp.ne.s32.totalorder %s92, %s93
      %p105 = scmp.eq.s32.totalorder %s20, 1
      %p106 = por %p104, %p105
      %p108 = scmp.ne.s32.totalorder %s93, %s107
      %p109 = scmp.eq.s32.totalorder %s20, 0
      %p110 = por %p108, %p109
      %s112 = sadd.s32 %s111, 1
      %p115 = scmp.eq.s32.totalorder %s14, 1
      %p116 = scmp.ne.s32.totalorder %s111, %s113
      %p117 = scmp.eq.s32.totalorder %s14, 0
      %p118 = por %p116, %p117
      %p119 = scmp.ne.s32.totalorder %s111, %s113
      %p120 = scmp.eq.s32.totalorder %s19, 1
      %p121 = por %p119, %p120
      %p122 = scmp.ne.s32.totalorder %s113, %s114
      %p123 = scmp.eq.s32.totalorder %s19, 0
      %p124 = por %p122, %p123
      %p125 = scmp.ne.s32.totalorder %s113, %s114
      %p126 = scmp.eq.s32.totalorder %s20, 1
      %p127 = por %p125, %p126
      %p129 = scmp.ne.s32.totalorder %s114, %s128
      %p130 = scmp.eq.s32.totalorder %s20, 0
      %p131 = por %p129, %p130
      %s132 = ssub.s32 %s14, %s21
      %p133 = scmp.eq.s32.totalorder %s132, 0
      %s135 = sadd.s32 %s134, 1
      %s136 = scalar_select %p133, %s134, %s135
      %p139 = pneg %p133
      %p140 = scmp.eq.s32.totalorder %s14, 1
      %p141 = por %p139, %p140
      %p142 = scmp.ne.s32.totalorder %s134, %s137
      %p143 = scmp.eq.s32.totalorder %s14, 0
      %p144 = por %p142, %p143
      %p145 = scmp.ne.s32.totalorder %s134, %s137
      %p146 = scmp.eq.s32.totalorder %s19, 1
      %p147 = por %p145, %p146
      %p148 = scmp.ne.s32.totalorder %s137, %s138
      %p149 = scmp.eq.s32.totalorder %s19, 0
      %p150 = por %p148, %p149
      %p151 = scmp.ne.s32.totalorder %s137, %s138
      %p152 = scmp.eq.s32.totalorder %s20, 1
      %p153 = por %p151, %p152
      %p155 = scmp.ne.s32.totalorder %s138, %s154
      %p156 = scmp.eq.s32.totalorder %s20, 0
      %p157 = por %p155, %p156
      %p158 = scmp.le.s32.totalorder 1, %s14
      %p159 = scmp.lt.s32.totalorder %s14, 3
      %p160 = pnand %p158, %p159
      %p161 = pneg %p160
      // Predicated region
      $region9: #{tpu_custom_call.1} parent=5 // pred_check
        _
      $region10: #{tpu_custom_call.1} parent=5 // pred_check_branch
        %163 = sbr.rel (%p160) target = $region12
      $region11: #{tpu_custom_call.1} parent=5 // pred_region
        %s164 = ssub.s32 %s14, 1
        // Predicated region
        $region13: #{tpu_custom_call.1} parent=11 // pred_check
          %p165 = pneg %p61
        $region14: #{tpu_custom_call.1} parent=11 // pred_check_branch
          %167 = sbr.rel (%p165) target = $region16
        $region15: #{tpu_custom_call.1} parent=11 // pred_region
          _
        $region16: #{tpu_custom_call.1} parent=11 // pred_fallthru
          _
        // Predicated region
        $region17: #{tpu_custom_call.1} parent=11 // pred_check
          %p168 = pneg %p82
        $region18: #{tpu_custom_call.1} parent=11 // pred_check_branch
          %170 = sbr.rel (%p168) target = $region20
        $region19: #{tpu_custom_call.1} parent=11 // pred_region
          _
        $region20: #{tpu_custom_call.1} parent=11 // pred_fallthru
          _
        // Predicated region
        $region21: #{tpu_custom_call.1} parent=11 // pred_check
          %p171 = pneg %p103
        $region22: #{tpu_custom_call.1} parent=11 // pred_check_branch
          %173 = sbr.rel (%p171) target = $region24
        $region23: #{tpu_custom_call.1} parent=11 // pred_region
          _
        $region24: #{tpu_custom_call.1} parent=11 // pred_fallthru
          _
        // Predicated region
        $region25: #{tpu_custom_call.1} parent=11 // pred_check
          %p174 = pneg %p124
        $region26: #{tpu_custom_call.1} parent=11 // pred_check_branch
          %176 = sbr.rel (%p174) target = $region28
        $region27: #{tpu_custom_call.1} parent=11 // pred_region
          _
        $region28: #{tpu_custom_call.1} parent=11 // pred_fallthru
          _
      $region12: #{tpu_custom_call.1} parent=5 // pred_fallthru
        _
      %p177 = scmp.lt.s32.totalorder %s14, 2
      // Predicated region
      $region29: #{tpu_custom_call.1} parent=5 // pred_check
        %p178 = pneg %p177
      $region30: #{tpu_custom_call.1} parent=5 // pred_check_branch
        %180 = sbr.rel (%p178) target = $region32
      $region31: #{tpu_custom_call.1} parent=5 // pred_region
        // Predicated region
        $region33: #{tpu_custom_call.1} parent=31 // pred_check
          %p181 = pneg %p34
        $region34: #{tpu_custom_call.1} parent=31 // pred_check_branch
          %183 = sbr.rel (%p181) target = $region36
        $region35: #{tpu_custom_call.1} parent=31 // pred_region
          %p184 = scmp.lt.s32.totalorder %s14, 1
          %s185 = scalar_select %p184, %s14, 1
          %s186 = smul.addr %s185, 2
          %s187 = smul.addr %s186, 8
          %s188 = scalar_lea.vmem %s0, %s187
        $region36: #{tpu_custom_call.1} parent=31 // pred_fallthru
          _
      $region32: #{tpu_custom_call.1} parent=5 // pred_fallthru
        _
      %p189 = scmp.le.s32.totalorder 1, %s14
      %p190 = scmp.lt.s32.totalorder %s14, 3
      %p191 = pnand %p189, %p190
      %p192 = pneg %p191
      // Predicated region
      $region37: #{tpu_custom_call.1} parent=5 // pred_check
        _
      $region38: #{tpu_custom_call.1} parent=5 // pred_check_branch
        %194 = sbr.rel (%p191) target = $region40
      $region39: #{tpu_custom_call.1} parent=5 // pred_region
        %s195 = ssub.s32 %s14, 1
        %p196 = scmp.lt.s32.totalorder %s19, 1
        %s197 = scalar_select %p196, %s19, 1
        %s198 = smul.addr %s197, 2
        %s199 = smul.addr %s198, 8
        %s200 = scalar_lea.vmem %s0, %s199
        %p201 = pneg %p40
        %p202 = pneg %p37
        %p203 = pneg %p61
        %p204 = pneg %p58
        %p205 = pneg %p82
        %p206 = pneg %p79
        %p207 = pneg %p103
        %p208 = pneg %p100
        %p209 = pneg %p124
        %p210 = pneg %p121
        %p211 = pneg %p150
        %p212 = pneg %p147
        %s213 = sand.u32 %s137, 1
        %s214 = scalar_lea.sflag [#allocation3], %s213
        %s215 = sand.u32 %s137, 1
        %s216 = smul.addr %s215, 16
        %s217 = scalar_lea.vmem [#allocation2], %s216
        %p218 = scmp.lt.s32.totalorder %s19, 1
        %s219 = scalar_select %p218, %s19, 1
        %s220 = smul.addr %s219, 2
        %s221 = smul.addr %s220, 8
        %s222 = scalar_lea.vmem %s0, %s221
        %v223 = vld [vmem:[%s222] sm:$0xff]
        %v224 = vld [vmem:[%s222 + $0x8] sm:$0xff]
        %v225 = vld [vmem:[%s1] sm:$0xff]
        %v226 = vld [vmem:[%s1 + $0x8] sm:$0xff]
        %v227 = vld [vmem:[%s1 + $0x10] sm:$0xff]
        %v228 = vld [vmem:[%s1 + $0x18] sm:$0xff]
        %v229 = vld [vmem:[%s1 + $0x20] sm:$0xff]
        %v230 = vld [vmem:[%s1 + $0x28] sm:$0xff]
        %v231 = vld [vmem:[%s1 + $0x30] sm:$0xff]
        %v232 = vld [vmem:[%s1 + $0x38] sm:$0xff]
        %v233 = vld [vmem:[%s1 + $0x40] sm:$0xff]
        %v234 = vld [vmem:[%s1 + $0x48] sm:$0xff]
        %v235 = vld [vmem:[%s1 + $0x50] sm:$0xff]
        %v236 = vld [vmem:[%s1 + $0x58] sm:$0xff]
        %v237 = vld [vmem:[%s3] sm:$0xff]
        %v238 = vld [vmem:[%s3 + $0x8] sm:$0xff]
        %v239 = vld [vmem:[%s3 + $0x10] sm:$0xff]
        %v240 = vld [vmem:[%s3 + $0x18] sm:$0xff]
        %v241 = vld [vmem:[%s2] sm:$0x1]
        %v243 = vlaneseq
        %v244 = vshrl.u32 %v243, 7
        %v245 = vsub.s32 0, %v244
        %v246 = vrot.slane %v241, %v245
        %vm248 = vcmask 261120
        %v250 = vsel %vm248, %v223, 0
        %v253 = vsel %vm248, %v224, 0
        %v256 = vsel %vm248, %v225, 0
        %v259 = vsel %vm248, %v226, 0
        %v262 = vsel %vm248, %v227, 0
        %v265 = vsel %vm248, %v228, 0
        %v268 = vsel %vm248, %v229, 0
        %v271 = vsel %vm248, %v230, 0
        %v274 = vsel %vm248, %v231, 0
        %v277 = vsel %vm248, %v232, 0
        %v280 = vsel %vm248, %v233, 0
        %v283 = vsel %vm248, %v234, 0
        %v286 = vsel %vm248, %v235, 0
        %v289 = vsel %vm248, %v236, 0
        %291 = vmatprep.subr.mxu0 0.0
        %292 = vmatpush1.xpose.msra.mxu0 %v256
        %293 = vmatprep.subr.mxu0 0.0
        %294 = vmatpush1.xpose.msra.mxu0 %v259
        %295 = vmatprep.subr.mxu0 0.0
        %296 = vmatpush1.xpose.msra.mxu0 %v262
        %297 = vmatprep.subr.mxu0 0.0
        %298 = vmatpush1.xpose.msra.mxu0 %v265
        %299 = vmatprep.subr.mxu0 0.0
        %300 = vmatpush1.xpose.msra.mxu0 %v268
        %301 = vmatprep.subr.mxu0 0.0
        %302 = vmatpush1.xpose.msra.mxu0 %v271
        %303 = vmatprep.subr.mxu0 0.0
        %304 = vmatpush1.xpose.msra.mxu0 %v274
        %305 = vmatprep.subr.mxu0 0.0
        %306 = vmatpush1.xpose.msra.mxu0 %v277
        %307 = vmatprep.subr.mxu0 0.0
        %308 = vmatpush1.xpose.msra.mxu0 %v280
        %309 = vmatprep.subr.mxu0 0.0
        %310 = vmatpush1.xpose.msra.mxu0 %v283
        %311 = vmatprep.subr.mxu0 0.0
        %312 = vmatpush1.xpose.msra.mxu0 %v286
        %313 = vmatprep.subr.mxu0 0.0
        %314 = vmatpush1.xpose.msra.mxu0 %v289
        %315 = vmatprep.subr.mxu0 0.0
        %316 = vmatpush1.xpose.msra.mxu0 0.0
        %317 = vmatprep.subr.mxu0 0.0
        %318 = vmatpush1.xpose.msra.mxu0 0.0
        %319 = vmatprep.subr.mxu0 0.0
        %320 = vmatpush1.xpose.msra.mxu0 0.0
        %321 = vmatprep.subr.mxu0 0.0
        %322 = vmatpush1.xpose.msra.mxu0 0.0
        %323 = vmatprep.subr.mxu0 0.0
        %324 = vmatpush1.xpose.msra.mxu0 0.0
        %325 = vmatprep.subr.mxu0 0.0
        %326 = vmatpush1.xpose.msra.mxu0 0.0
        %327 = vmatprep.subr.mxu0 0.0
        %328 = vmatpush1.xpose.msra.mxu0 0.0
        %329 = vmatprep.subr.mxu0 0.0
        %330 = vmatpush1.xpose.msra.mxu0 0.0
        %331 = vmatprep.subr.mxu0 0.0
        %332 = vmatpush1.xpose.msra.mxu0 0.0
        %333 = vmatprep.subr.mxu0 0.0
        %334 = vmatpush1.xpose.msra.mxu0 0.0
        %335 = vmatprep.subr.mxu0 0.0
        %336 = vmatpush1.xpose.msra.mxu0 0.0
        %337 = vmatprep.subr.mxu0 0.0
        %338 = vmatpush1.xpose.msra.mxu0 0.0
        %339 = vmatprep.subr.mxu0 0.0
        %340 = vmatpush1.xpose.msra.mxu0 0.0
        %341 = vmatprep.subr.mxu0 0.0
        %342 = vmatpush1.xpose.msra.mxu0 0.0
        %343 = vmatprep.subr.mxu0 0.0
        %344 = vmatpush1.xpose.msra.mxu0 0.0
        %345 = vmatprep.subr.mxu0 0.0
        %346 = vmatpush1.xpose.msra.mxu0 0.0
        %347 = vmatprep.subr.mxu0 0.0
        %348 = vmatpush1.xpose.msra.mxu0 0.0
        %349 = vmatprep.subr.mxu0 0.0
        %350 = vmatpush1.xpose.msra.mxu0 0.0
        %351 = vmatprep.subr.mxu0 0.0
        %352 = vmatpush1.xpose.msra.mxu0 0.0
        %353 = vmatprep.subr.mxu0 0.0
        %354 = vmatpush1.xpose.msra.mxu0 0.0
        %355 = vmatprep.mubr.f32.mxu0 0.0
        %356 = vmatmul.mubr.f32.gmra.mrb[0].mxu0 %v250
        %v357 = vpop.f32.mrb[0].mxu0
        %v358 = vadd.f32 %v246, %v357
        %v359 = vpop.f32.mrb[0].mxu0
        %360 = vmatprep.mubr.f32.mxu0 0.0
        %361 = vmatmul.mubr.f32.gmra.mrb[0].mxu0 %v253
        %v362 = vpop.f32.mrb[0].mxu0
        %v363 = vadd.f32 %v246, %v362
        %v364 = vpop.f32.mrb[0].mxu0
        %365 = vdwg.mxu0
        %368 = vrot.lane.b32.xlu0 %v358, 96
        %v369 = vpop.permute.xlu0 %368
        %370 = vrot.lane.b32.xlu0 %v363, 96
        %v371 = vpop.permute.xlu0 %370
        %vm372 = vcmask 64512
        %v373 = vsel %vm372, %v358, 0
        %v375 = vsel %vm372, %v363, 0
        %v377 = vsel %vm372, %v369, 0
        %v379 = vsel %vm372, %v371, 0
        %381 = vmatprep.subr.mxu0 0.0
        %382 = vmatpush1.xpose.msra.mxu0 %v377
        %383 = vmatprep.subr.mxu0 0.0
        %384 = vmatpush1.xpose.msra.mxu0 %v379
        %385 = vmatprep.subr.mxu0 0.0
        %386 = vmatpush1.xpose.msra.mxu0 0.0
        %387 = vmatprep.subr.mxu0 0.0
        %388 = vmatpush1.xpose.msra.mxu0 0.0
        %389 = vmatprep.subr.mxu0 0.0
        %390 = vmatpush1.xpose.msra.mxu0 0.0
        %391 = vmatprep.subr.mxu0 0.0
        %392 = vmatpush1.xpose.msra.mxu0 0.0
        %393 = vmatprep.subr.mxu0 0.0
        %394 = vmatpush1.xpose.msra.mxu0 0.0
        %395 = vmatprep.subr.mxu0 0.0
        %396 = vmatpush1.xpose.msra.mxu0 0.0
        %397 = vmatprep.subr.mxu0 0.0
        %398 = vmatpush1.xpose.msra.mxu0 0.0
        %399 = vmatprep.subr.mxu0 0.0
        %400 = vmatpush1.xpose.msra.mxu0 0.0
        %401 = vmatprep.subr.mxu0 0.0
        %402 = vmatpush1.xpose.msra.mxu0 0.0
        %403 = vmatprep.subr.mxu0 0.0
        %404 = vmatpush1.xpose.msra.mxu0 0.0
        %405 = vmatprep.subr.mxu0 0.0
        %406 = vmatpush1.xpose.msra.mxu0 0.0
        %407 = vmatprep.subr.mxu0 0.0
        %408 = vmatpush1.xpose.msra.mxu0 0.0
        %409 = vmatprep.subr.mxu0 0.0
        %410 = vmatpush1.xpose.msra.mxu0 0.0
        %411 = vmatprep.subr.mxu0 0.0
        %412 = vmatpush1.xpose.msra.mxu0 0.0
        %413 = vmatprep.subr.mxu0 0.0
        %414 = vmatpush1.xpose.msra.mxu0 0.0
        %415 = vmatprep.subr.mxu0 0.0
        %416 = vmatpush1.xpose.msra.mxu0 0.0
        %417 = vmatprep.subr.mxu0 0.0
        %418 = vmatpush1.xpose.msra.mxu0 0.0
        %419 = vmatprep.subr.mxu0 0.0
        %420 = vmatpush1.xpose.msra.mxu0 0.0
        %421 = vmatprep.subr.mxu0 0.0
        %422 = vmatpush1.xpose.msra.mxu0 0.0
        %423 = vmatprep.subr.mxu0 0.0
        %424 = vmatpush1.xpose.msra.mxu0 0.0
        %425 = vmatprep.subr.mxu0 0.0
        %426 = vmatpush1.xpose.msra.mxu0 0.0
        %427 = vmatprep.subr.mxu0 0.0
        %428 = vmatpush1.xpose.msra.mxu0 0.0
        %429 = vmatprep.subr.mxu0 0.0
        %430 = vmatpush1.xpose.msra.mxu0 0.0
        %431 = vmatprep.subr.mxu0 0.0
        %432 = vmatpush1.xpose.msra.mxu0 0.0
        %433 = vmatprep.subr.mxu0 0.0
        %434 = vmatpush1.xpose.msra.mxu0 0.0
        %435 = vmatprep.subr.mxu0 0.0
        %436 = vmatpush1.xpose.msra.mxu0 0.0
        %437 = vmatprep.subr.mxu0 0.0
        %438 = vmatpush1.xpose.msra.mxu0 0.0
        %439 = vmatprep.subr.mxu0 0.0
        %440 = vmatpush1.xpose.msra.mxu0 0.0
        %441 = vmatprep.subr.mxu0 0.0
        %442 = vmatpush1.xpose.msra.mxu0 0.0
        %443 = vmatprep.subr.mxu0 0.0
        %444 = vmatpush1.xpose.msra.mxu0 0.0
        %445 = vmatprep.mubr.f32.mxu0 0.0
        %446 = vmatmul.mubr.f32.gmra.mrb[0].mxu0 %v373
        %v447 = vpop.f32.mrb[0].mxu0
        %v448 = vadd.f32 0.0, %v447
        %v449 = vpop.f32.mrb[0].mxu0
        %450 = vmatprep.mubr.f32.mxu0 0.0
        %451 = vmatmul.mubr.f32.gmra.mrb[0].mxu0 %v375
        %v452 = vpop.f32.mrb[0].mxu0
        %v453 = vadd.f32 0.0, %v452
        %v454 = vpop.f32.mrb[0].mxu0
        %455 = vdwg.mxu0
        %v456 = vmul.f32 %v448, 0.35355338
        %v457 = vmul.f32 %v453, 0.35355338
        %vm458 = vcmask 130048
        %v459 = vsel %vm458, %v456, -inf
        %460 = vmax.xlane.f32.xlu0 %v459
        %v461 = vpop.xlane.xlu0 %460
        %v462 = vsel %vm458, %v457, -inf
        %463 = vmax.xlane.f32.xlu0 %v462
        %v464 = vpop.xlane.xlu0 %463
        %v465 = vsub.f32 %v456, %v461
        %v466 = vsub.f32 %v457, %v464
        %v467 = vmul.f32 %v465, 1.442695
        %v468 = vpow.pop %v467
        %v469 = vmul.f32 %v466, 1.442695
        %v470 = vpow.pop %v469
        %v471 = vsel %vm458, %v468, 0.0
        %472 = vadd.xlane.f32.xlu0 %v471
        %v473 = vpop.xlane.xlu0 %472
        %v474 = vsel %vm458, %v470, 0.0
        %475 = vadd.xlane.f32.xlu0 %v474
        %v476 = vpop.xlane.xlu0 %475
        %v477 = vrcp.pop %v473
        %v478 = vrcp.pop %v476
        %v479 = vmul.f32 %v468, %v477
        %v480 = vmul.f32 %v470, %v478
        %481 = vrot.lane.b32.xlu0 %v358, 64
        %v482 = vpop.permute.xlu0 %481
        %483 = vrot.lane.b32.xlu0 %v363, 64
        %v484 = vpop.permute.xlu0 %483
        %v488 = vsel %vm458, %v479, 0
        %v491 = vsel %vm458, %v480, 0
        %493 = vmatprep.subr.mxu0 0.0
        %494 = vmatpush1.msra.mxu0 %v482
        %495 = vmatprep.subr.mxu0 0.0
        %496 = vmatpush1.msra.mxu0 %v484
        %497 = vmatprep.subr.mxu0 0.0
        %498 = vmatpush1.msra.mxu0 0.0
        %499 = vmatprep.subr.mxu0 0.0
        %500 = vmatpush1.msra.mxu0 0.0
        %501 = vmatprep.subr.mxu0 0.0
        %502 = vmatpush1.msra.mxu0 0.0
        %503 = vmatprep.subr.mxu0 0.0
        %504 = vmatpush1.msra.mxu0 0.0
        %505 = vmatprep.subr.mxu0 0.0
        %506 = vmatpush1.msra.mxu0 0.0
        %507 = vmatprep.subr.mxu0 0.0
        %508 = vmatpush1.msra.mxu0 0.0
        %509 = vmatprep.subr.mxu0 0.0
        %510 = vmatpush1.msra.mxu0 0.0
        %511 = vmatprep.subr.mxu0 0.0
        %512 = vmatpush1.msra.mxu0 0.0
        %513 = vmatprep.subr.mxu0 0.0
        %514 = vmatpush1.msra.mxu0 0.0
        %515 = vmatprep.subr.mxu0 0.0
        %516 = vmatpush1.msra.mxu0 0.0
        %517 = vmatprep.subr.mxu0 0.0
        %518 = vmatpush1.msra.mxu0 0.0
        %519 = vmatprep.subr.mxu0 0.0
        %520 = vmatpush1.msra.mxu0 0.0
        %521 = vmatprep.subr.mxu0 0.0
        %522 = vmatpush1.msra.mxu0 0.0
        %523 = vmatprep.subr.mxu0 0.0
        %524 = vmatpush1.msra.mxu0 0.0
        %525 = vmatprep.subr.mxu0 0.0
        %526 = vmatpush1.msra.mxu0 0.0
        %527 = vmatprep.subr.mxu0 0.0
        %528 = vmatpush1.msra.mxu0 0.0
        %529 = vmatprep.subr.mxu0 0.0
        %530 = vmatpush1.msra.mxu0 0.0
        %531 = vmatprep.subr.mxu0 0.0
        %532 = vmatpush1.msra.mxu0 0.0
        %533 = vmatprep.subr.mxu0 0.0
        %534 = vmatpush1.msra.mxu0 0.0
        %535 = vmatprep.subr.mxu0 0.0
        %536 = vmatpush1.msra.mxu0 0.0
        %537 = vmatprep.subr.mxu0 0.0
        %538 = vmatpush1.msra.mxu0 0.0
        %539 = vmatprep.subr.mxu0 0.0
        %540 = vmatpush1.msra.mxu0 0.0
        %541 = vmatprep.subr.mxu0 0.0
        %542 = vmatpush1.msra.mxu0 0.0
        %543 = vmatprep.subr.mxu0 0.0
        %544 = vmatpush1.msra.mxu0 0.0
        %545 = vmatprep.subr.mxu0 0.0
        %546 = vmatpush1.msra.mxu0 0.0
        %547 = vmatprep.subr.mxu0 0.0
        %548 = vmatpush1.msra.mxu0 0.0
        %549 = vmatprep.subr.mxu0 0.0
        %550 = vmatpush1.msra.mxu0 0.0
        %551 = vmatprep.subr.mxu0 0.0
        %552 = vmatpush1.msra.mxu0 0.0
        %553 = vmatprep.subr.mxu0 0.0
        %554 = vmatpush1.msra.mxu0 0.0
        %555 = vmatprep.subr.mxu0 0.0
        %556 = vmatpush1.msra.mxu0 0.0
        %557 = vmatprep.mubr.f32.mxu0 0.0
        %558 = vmatmul.mubr.f32.gmra.mrb[0].mxu0 %v488
        %v559 = vpop.f32.mrb[0].mxu0
        %v560 = vadd.f32 0.0, %v559
        %v561 = vpop.f32.mrb[0].mxu0
        %562 = vmatprep.mubr.f32.mxu0 0.0
        %563 = vmatmul.mubr.f32.gmra.mrb[0].mxu0 %v491
        %v564 = vpop.f32.mrb[0].mxu0
        %v565 = vadd.f32 0.0, %v564
        %v566 = vpop.f32.mrb[0].mxu0
        %567 = vdwg.mxu0
        %568 = vrot.lane.b32.xlu0 %v358, 120
        %v569 = vpop.permute.xlu0 %568
        %570 = vrot.lane.b32.xlu0 %v363, 120
        %v571 = vpop.permute.xlu0 %570
        %572 = vrot.lane.b32.xlu0 %v358, 88
        %v573 = vpop.permute.xlu0 %572
        %574 = vrot.lane.b32.xlu0 %v363, 88
        %v575 = vpop.permute.xlu0 %574
        %v576 = vsel %vm372, %v569, 0
        %v578 = vsel %vm372, %v571, 0
        %v580 = vsel %vm372, %v573, 0
        %v582 = vsel %vm372, %v575, 0
        %584 = vmatprep.subr.mxu0 0.0
        %585 = vmatpush1.xpose.msra.mxu0 %v580
        %586 = vmatprep.subr.mxu0 0.0
        %587 = vmatpush1.xpose.msra.mxu0 %v582
        %588 = vmatprep.subr.mxu0 0.0
        %589 = vmatpush1.xpose.msra.mxu0 0.0
        %590 = vmatprep.subr.mxu0 0.0
        %591 = vmatpush1.xpose.msra.mxu0 0.0
        %592 = vmatprep.subr.mxu0 0.0
        %593 = vmatpush1.xpose.msra.mxu0 0.0
        %594 = vmatprep.subr.mxu0 0.0
        %595 = vmatpush1.xpose.msra.mxu0 0.0
        %596 = vmatprep.subr.mxu0 0.0
        %597 = vmatpush1.xpose.msra.mxu0 0.0
        %598 = vmatprep.subr.mxu0 0.0
        %599 = vmatpush1.xpose.msra.mxu0 0.0
        %600 = vmatprep.subr.mxu0 0.0
        %601 = vmatpush1.xpose.msra.mxu0 0.0
        %602 = vmatprep.subr.mxu0 0.0
        %603 = vmatpush1.xpose.msra.mxu0 0.0
        %604 = vmatprep.subr.mxu0 0.0
        %605 = vmatpush1.xpose.msra.mxu0 0.0
        %606 = vmatprep.subr.mxu0 0.0
        %607 = vmatpush1.xpose.msra.mxu0 0.0
        %608 = vmatprep.subr.mxu0 0.0
        %609 = vmatpush1.xpose.msra.mxu0 0.0
        %610 = vmatprep.subr.mxu0 0.0
        %611 = vmatpush1.xpose.msra.mxu0 0.0
        %612 = vmatprep.subr.mxu0 0.0
        %613 = vmatpush1.xpose.msra.mxu0 0.0
        %614 = vmatprep.subr.mxu0 0.0
        %615 = vmatpush1.xpose.msra.mxu0 0.0
        %616 = vmatprep.subr.mxu0 0.0
        %617 = vmatpush1.xpose.msra.mxu0 0.0
        %618 = vmatprep.subr.mxu0 0.0
        %619 = vmatpush1.xpose.msra.mxu0 0.0
        %620 = vmatprep.subr.mxu0 0.0
        %621 = vmatpush1.xpose.msra.mxu0 0.0
        %622 = vmatprep.subr.mxu0 0.0
        %623 = vmatpush1.xpose.msra.mxu0 0.0
        %624 = vmatprep.subr.mxu0 0.0
        %625 = vmatpush1.xpose.msra.mxu0 0.0
        %626 = vmatprep.subr.mxu0 0.0
        %627 = vmatpush1.xpose.msra.mxu0 0.0
        %628 = vmatprep.subr.mxu0 0.0
        %629 = vmatpush1.xpose.msra.mxu0 0.0
        %630 = vmatprep.subr.mxu0 0.0
        %631 = vmatpush1.xpose.msra.mxu0 0.0
        %632 = vmatprep.subr.mxu0 0.0
        %633 = vmatpush1.xpose.msra.mxu0 0.0
        %634 = vmatprep.subr.mxu0 0.0
        %635 = vmatpush1.xpose.msra.mxu0 0.0
        %636 = vmatprep.subr.mxu0 0.0
        %637 = vmatpush1.xpose.msra.mxu0 0.0
        %638 = vmatprep.subr.mxu0 0.0
        %639 = vmatpush1.xpose.msra.mxu0 0.0
        %640 = vmatprep.subr.mxu0 0.0
        %641 = vmatpush1.xpose.msra.mxu0 0.0
        %642 = vmatprep.subr.mxu0 0.0
        %643 = vmatpush1.xpose.msra.mxu0 0.0
        %644 = vmatprep.subr.mxu0 0.0
        %645 = vmatpush1.xpose.msra.mxu0 0.0
        %646 = vmatprep.subr.mxu0 0.0
        %647 = vmatpush1.xpose.msra.mxu0 0.0
        %648 = vmatprep.mubr.f32.mxu0 0.0
        %649 = vmatmul.mubr.f32.gmra.mrb[0].mxu0 %v576
        %v650 = vpop.f32.mrb[0].mxu0
        %v651 = vadd.f32 0.0, %v650
        %v652 = vpop.f32.mrb[0].mxu0
        %653 = vmatprep.mubr.f32.mxu0 0.0
        %654 = vmatmul.mubr.f32.gmra.mrb[0].mxu0 %v578
        %v655 = vpop.f32.mrb[0].mxu0
        %v656 = vadd.f32 0.0, %v655
        %v657 = vpop.f32.mrb[0].mxu0
        %658 = vdwg.mxu0
        %v659 = vmul.f32 %v651, 0.35355338
        %v660 = vmul.f32 %v656, 0.35355338
        %v661 = vsel %vm458, %v659, -inf
        %662 = vmax.xlane.f32.xlu0 %v661
        %v663 = vpop.xlane.xlu0 %662
        %v664 = vsel %vm458, %v660, -inf
        %665 = vmax.xlane.f32.xlu0 %v664
        %v666 = vpop.xlane.xlu0 %665
        %v667 = vsub.f32 %v659, %v663
        %v668 = vsub.f32 %v660, %v666
        %v669 = vmul.f32 %v667, 1.442695
        %v670 = vpow.pop %v669
        %v671 = vmul.f32 %v668, 1.442695
        %v672 = vpow.pop %v671
        %v673 = vsel %vm458, %v670, 0.0
        %674 = vadd.xlane.f32.xlu0 %v673
        %v675 = vpop.xlane.xlu0 %674
        %v676 = vsel %vm458, %v672, 0.0
        %677 = vadd.xlane.f32.xlu0 %v676
        %v678 = vpop.xlane.xlu0 %677
        %v679 = vrcp.pop %v675
        %v680 = vrcp.pop %v678
        %v681 = vmul.f32 %v670, %v679
        %v682 = vmul.f32 %v672, %v680
        %683 = vrot.lane.b32.xlu0 %v358, 56
        %v684 = vpop.permute.xlu0 %683
        %685 = vrot.lane.b32.xlu0 %v363, 56
        %v686 = vpop.permute.xlu0 %685
        %v690 = vsel %vm458, %v681, 0
        %v693 = vsel %vm458, %v682, 0
        %695 = vmatprep.subr.mxu0 0.0
        %696 = vmatpush1.msra.mxu0 %v684
        %697 = vmatprep.subr.mxu0 0.0
        %698 = vmatpush1.msra.mxu0 %v686
        %699 = vmatprep.subr.mxu0 0.0
        %700 = vmatpush1.msra.mxu0 0.0
        %701 = vmatprep.subr.mxu0 0.0
        %702 = vmatpush1.msra.mxu0 0.0
        %703 = vmatprep.subr.mxu0 0.0
        %704 = vmatpush1.msra.mxu0 0.0
        %705 = vmatprep.subr.mxu0 0.0
        %706 = vmatpush1.msra.mxu0 0.0
        %707 = vmatprep.subr.mxu0 0.0
        %708 = vmatpush1.msra.mxu0 0.0
        %709 = vmatprep.subr.mxu0 0.0
        %710 = vmatpush1.msra.mxu0 0.0
        %711 = vmatprep.subr.mxu0 0.0
        %712 = vmatpush1.msra.mxu0 0.0
        %713 = vmatprep.subr.mxu0 0.0
        %714 = vmatpush1.msra.mxu0 0.0
        %715 = vmatprep.subr.mxu0 0.0
        %716 = vmatpush1.msra.mxu0 0.0
        %717 = vmatprep.subr.mxu0 0.0
        %718 = vmatpush1.msra.mxu0 0.0
        %719 = vmatprep.subr.mxu0 0.0
        %720 = vmatpush1.msra.mxu0 0.0
        %721 = vmatprep.subr.mxu0 0.0
        %722 = vmatpush1.msra.mxu0 0.0
        %723 = vmatprep.subr.mxu0 0.0
        %724 = vmatpush1.msra.mxu0 0.0
        %725 = vmatprep.subr.mxu0 0.0
        %726 = vmatpush1.msra.mxu0 0.0
        %727 = vmatprep.subr.mxu0 0.0
        %728 = vmatpush1.msra.mxu0 0.0
        %729 = vmatprep.subr.mxu0 0.0
        %730 = vmatpush1.msra.mxu0 0.0
        %731 = vmatprep.subr.mxu0 0.0
        %732 = vmatpush1.msra.mxu0 0.0
        %733 = vmatprep.subr.mxu0 0.0
        %734 = vmatpush1.msra.mxu0 0.0
        %735 = vmatprep.subr.mxu0 0.0
        %736 = vmatpush1.msra.mxu0 0.0
        %737 = vmatprep.subr.mxu0 0.0
        %738 = vmatpush1.msra.mxu0 0.0
        %739 = vmatprep.subr.mxu0 0.0
        %740 = vmatpush1.msra.mxu0 0.0
        %741 = vmatprep.subr.mxu0 0.0
        %742 = vmatpush1.msra.mxu0 0.0
        %743 = vmatprep.subr.mxu0 0.0
        %744 = vmatpush1.msra.mxu0 0.0
        %745 = vmatprep.subr.mxu0 0.0
        %746 = vmatpush1.msra.mxu0 0.0
        %747 = vmatprep.subr.mxu0 0.0
        %748 = vmatpush1.msra.mxu0 0.0
        %749 = vmatprep.subr.mxu0 0.0
        %750 = vmatpush1.msra.mxu0 0.0
        %751 = vmatprep.subr.mxu0 0.0
        %752 = vmatpush1.msra.mxu0 0.0
        %753 = vmatprep.subr.mxu0 0.0
        %754 = vmatpush1.msra.mxu0 0.0
        %755 = vmatprep.subr.mxu0 0.0
        %756 = vmatpush1.msra.mxu0 0.0
        %757 = vmatprep.subr.mxu0 0.0
        %758 = vmatpush1.msra.mxu0 0.0
        %759 = vmatprep.mubr.f32.mxu0 0.0
        %760 = vmatmul.mubr.f32.gmra.mrb[0].mxu0 %v690
        %v761 = vpop.f32.mrb[0].mxu0
        %v762 = vadd.f32 0.0, %v761
        %v763 = vpop.f32.mrb[0].mxu0
        %764 = vmatprep.mubr.f32.mxu0 0.0
        %765 = vmatmul.mubr.f32.gmra.mrb[0].mxu0 %v693
        %v766 = vpop.f32.mrb[0].mxu0
        %v767 = vadd.f32 0.0, %v766
        %v768 = vpop.f32.mrb[0].mxu0
        %769 = vdwg.mxu0
        %774 = vrot.lane.b32.xlu0 %v237, 120
        %v775 = vpop.permute.xlu0 %774
        %776 = vrot.lane.b32.xlu0 %v238, 120
        %v777 = vpop.permute.xlu0 %776
        %778 = vrot.lane.b32.xlu0 %v239, 120
        %v779 = vpop.permute.xlu0 %778
        %780 = vrot.lane.b32.xlu0 %v240, 120
        %v781 = vpop.permute.xlu0 %780
        %v783 = vsel %vm372, %v762, 0
        %v786 = vsel %vm372, %v767, 0
        %v788 = vsel %vm372, %v775, 0
        %v790 = vsel %vm372, %v777, 0
        %v792 = vsel %vm372, %v779, 0
        %v794 = vsel %vm372, %v781, 0
        %796 = vmatprep.subr.mxu0 0.0
        %797 = vmatpush1.xpose.msra.mxu0 %v788
        %798 = vmatprep.subr.mxu0 0.0
        %799 = vmatpush1.xpose.msra.mxu0 %v790
        %800 = vmatprep.subr.mxu0 0.0
        %801 = vmatpush1.xpose.msra.mxu0 %v792
        %802 = vmatprep.subr.mxu0 0.0
        %803 = vmatpush1.xpose.msra.mxu0 %v794
        %804 = vmatprep.subr.mxu0 0.0
        %805 = vmatpush1.xpose.msra.mxu0 0.0
        %806 = vmatprep.subr.mxu0 0.0
        %807 = vmatpush1.xpose.msra.mxu0 0.0
        %808 = vmatprep.subr.mxu0 0.0
        %809 = vmatpush1.xpose.msra.mxu0 0.0
        %810 = vmatprep.subr.mxu0 0.0
        %811 = vmatpush1.xpose.msra.mxu0 0.0
        %812 = vmatprep.subr.mxu0 0.0
        %813 = vmatpush1.xpose.msra.mxu0 0.0
        %814 = vmatprep.subr.mxu0 0.0
        %815 = vmatpush1.xpose.msra.mxu0 0.0
        %816 = vmatprep.subr.mxu0 0.0
        %817 = vmatpush1.xpose.msra.mxu0 0.0
        %818 = vmatprep.subr.mxu0 0.0
        %819 = vmatpush1.xpose.msra.mxu0 0.0
        %820 = vmatprep.subr.mxu0 0.0
        %821 = vmatpush1.xpose.msra.mxu0 0.0
        %822 = vmatprep.subr.mxu0 0.0
        %823 = vmatpush1.xpose.msra.mxu0 0.0
        %824 = vmatprep.subr.mxu0 0.0
        %825 = vmatpush1.xpose.msra.mxu0 0.0
        %826 = vmatprep.subr.mxu0 0.0
        %827 = vmatpush1.xpose.msra.mxu0 0.0
        %828 = vmatprep.subr.mxu0 0.0
        %829 = vmatpush1.xpose.msra.mxu0 0.0
        %830 = vmatprep.subr.mxu0 0.0
        %831 = vmatpush1.xpose.msra.mxu0 0.0
        %832 = vmatprep.subr.mxu0 0.0
        %833 = vmatpush1.xpose.msra.mxu0 0.0
        %834 = vmatprep.subr.mxu0 0.0
        %835 = vmatpush1.xpose.msra.mxu0 0.0
        %836 = vmatprep.subr.mxu0 0.0
        %837 = vmatpush1.xpose.msra.mxu0 0.0
        %838 = vmatprep.subr.mxu0 0.0
        %839 = vmatpush1.xpose.msra.mxu0 0.0
        %840 = vmatprep.subr.mxu0 0.0
        %841 = vmatpush1.xpose.msra.mxu0 0.0
        %842 = vmatprep.subr.mxu0 0.0
        %843 = vmatpush1.xpose.msra.mxu0 0.0
        %844 = vmatprep.subr.mxu0 0.0
        %845 = vmatpush1.xpose.msra.mxu0 0.0
        %846 = vmatprep.subr.mxu0 0.0
        %847 = vmatpush1.xpose.msra.mxu0 0.0
        %848 = vmatprep.subr.mxu0 0.0
        %849 = vmatpush1.xpose.msra.mxu0 0.0
        %850 = vmatprep.subr.mxu0 0.0
        %851 = vmatpush1.xpose.msra.mxu0 0.0
        %852 = vmatprep.subr.mxu0 0.0
        %853 = vmatpush1.xpose.msra.mxu0 0.0
        %854 = vmatprep.subr.mxu0 0.0
        %855 = vmatpush1.xpose.msra.mxu0 0.0
        %856 = vmatprep.subr.mxu0 0.0
        %857 = vmatpush1.xpose.msra.mxu0 0.0
        %858 = vmatprep.subr.mxu0 0.0
        %859 = vmatpush1.xpose.msra.mxu0 0.0
        %860 = vmatprep.mubr.f32.mxu0 0.0
        %861 = vmatmul.mubr.f32.gmra.mrb[0].mxu0 %v783
        %v862 = vpop.f32.mrb[0].mxu0
        %v863 = vadd.f32 0.0, %v862
        %v864 = vpop.f32.mrb[0].mxu0
        %865 = vmatprep.mubr.f32.mxu0 0.0
        %866 = vmatmul.mubr.f32.gmra.mrb[0].mxu0 %v786
        %v867 = vpop.f32.mrb[0].mxu0
        %v868 = vadd.f32 0.0, %v867
        %v869 = vpop.f32.mrb[0].mxu0
        %870 = vdwg.mxu0
        %v872 = vsel %vm372, %v560, 0
        %v875 = vsel %vm372, %v565, 0
        %v877 = vsel %vm372, %v237, 0
        %v879 = vsel %vm372, %v238, 0
        %v881 = vsel %vm372, %v239, 0
        %v883 = vsel %vm372, %v240, 0
        %885 = vmatprep.subr.mxu0 0.0
        %886 = vmatpush1.xpose.msra.mxu0 %v877
        %887 = vmatprep.subr.mxu0 0.0
        %888 = vmatpush1.xpose.msra.mxu0 %v879
        %889 = vmatprep.subr.mxu0 0.0
        %890 = vmatpush1.xpose.msra.mxu0 %v881
        %891 = vmatprep.subr.mxu0 0.0
        %892 = vmatpush1.xpose.msra.mxu0 %v883
        %893 = vmatprep.subr.mxu0 0.0
        %894 = vmatpush1.xpose.msra.mxu0 0.0
        %895 = vmatprep.subr.mxu0 0.0
        %896 = vmatpush1.xpose.msra.mxu0 0.0
        %897 = vmatprep.subr.mxu0 0.0
        %898 = vmatpush1.xpose.msra.mxu0 0.0
        %899 = vmatprep.subr.mxu0 0.0
        %900 = vmatpush1.xpose.msra.mxu0 0.0
        %901 = vmatprep.subr.mxu0 0.0
        %902 = vmatpush1.xpose.msra.mxu0 0.0
        %903 = vmatprep.subr.mxu0 0.0
        %904 = vmatpush1.xpose.msra.mxu0 0.0
        %905 = vmatprep.subr.mxu0 0.0
        %906 = vmatpush1.xpose.msra.mxu0 0.0
        %907 = vmatprep.subr.mxu0 0.0
        %908 = vmatpush1.xpose.msra.mxu0 0.0
        %909 = vmatprep.subr.mxu0 0.0
        %910 = vmatpush1.xpose.msra.mxu0 0.0
        %911 = vmatprep.subr.mxu0 0.0
        %912 = vmatpush1.xpose.msra.mxu0 0.0
        %913 = vmatprep.subr.mxu0 0.0
        %914 = vmatpush1.xpose.msra.mxu0 0.0
        %915 = vmatprep.subr.mxu0 0.0
        %916 = vmatpush1.xpose.msra.mxu0 0.0
        %917 = vmatprep.subr.mxu0 0.0
        %918 = vmatpush1.xpose.msra.mxu0 0.0
        %919 = vmatprep.subr.mxu0 0.0
        %920 = vmatpush1.xpose.msra.mxu0 0.0
        %921 = vmatprep.subr.mxu0 0.0
        %922 = vmatpush1.xpose.msra.mxu0 0.0
        %923 = vmatprep.subr.mxu0 0.0
        %924 = vmatpush1.xpose.msra.mxu0 0.0
        %925 = vmatprep.subr.mxu0 0.0
        %926 = vmatpush1.xpose.msra.mxu0 0.0
        %927 = vmatprep.subr.mxu0 0.0
        %928 = vmatpush1.xpose.msra.mxu0 0.0
        %929 = vmatprep.subr.mxu0 0.0
        %930 = vmatpush1.xpose.msra.mxu0 0.0
        %931 = vmatprep.subr.mxu0 0.0
        %932 = vmatpush1.xpose.msra.mxu0 0.0
        %933 = vmatprep.subr.mxu0 0.0
        %934 = vmatpush1.xpose.msra.mxu0 0.0
        %935 = vmatprep.subr.mxu0 0.0
        %936 = vmatpush1.xpose.msra.mxu0 0.0
        %937 = vmatprep.subr.mxu0 0.0
        %938 = vmatpush1.xpose.msra.mxu0 0.0
        %939 = vmatprep.subr.mxu0 0.0
        %940 = vmatpush1.xpose.msra.mxu0 0.0
        %941 = vmatprep.subr.mxu0 0.0
        %942 = vmatpush1.xpose.msra.mxu0 0.0
        %943 = vmatprep.subr.mxu0 0.0
        %944 = vmatpush1.xpose.msra.mxu0 0.0
        %945 = vmatprep.subr.mxu0 0.0
        %946 = vmatpush1.xpose.msra.mxu0 0.0
        %947 = vmatprep.subr.mxu0 0.0
        %948 = vmatpush1.xpose.msra.mxu0 0.0
        %949 = vmatprep.mubr.f32.mxu0 0.0
        %950 = vmatmul.mubr.f32.gmra.mrb[0].mxu0 %v872
        %v951 = vpop.f32.mrb[0].mxu0
        %v952 = vadd.f32 %v863, %v951
        %v953 = vpop.f32.mrb[0].mxu0
        %954 = vmatprep.mubr.f32.mxu0 0.0
        %955 = vmatmul.mubr.f32.gmra.mrb[0].mxu0 %v875
        %v956 = vpop.f32.mrb[0].mxu0
        %v957 = vadd.f32 %v868, %v956
        %v958 = vpop.f32.mrb[0].mxu0
        %959 = vdwg.mxu0
        %960 = vrot.lane.b32.xlu0 %v358, 112
        %v961 = vpop.permute.xlu0 %960
        %962 = vrot.lane.b32.xlu0 %v363, 112
        %v963 = vpop.permute.xlu0 %962
        %964 = vrot.lane.b32.xlu0 %v358, 80
        %v965 = vpop.permute.xlu0 %964
        %966 = vrot.lane.b32.xlu0 %v363, 80
        %v967 = vpop.permute.xlu0 %966
        %v968 = vsel %vm372, %v961, 0
        %v970 = vsel %vm372, %v963, 0
        %v972 = vsel %vm372, %v965, 0
        %v974 = vsel %vm372, %v967, 0
        %976 = vmatprep.subr.mxu0 0.0
        %977 = vmatpush1.xpose.msra.mxu0 %v972
        %978 = vmatprep.subr.mxu0 0.0
        %979 = vmatpush1.xpose.msra.mxu0 %v974
        %980 = vmatprep.subr.mxu0 0.0
        %981 = vmatpush1.xpose.msra.mxu0 0.0
        %982 = vmatprep.subr.mxu0 0.0
        %983 = vmatpush1.xpose.msra.mxu0 0.0
        %984 = vmatprep.subr.mxu0 0.0
        %985 = vmatpush1.xpose.msra.mxu0 0.0
        %986 = vmatprep.subr.mxu0 0.0
        %987 = vmatpush1.xpose.msra.mxu0 0.0
        %988 = vmatprep.subr.mxu0 0.0
        %989 = vmatpush1.xpose.msra.mxu0 0.0
        %990 = vmatprep.subr.mxu0 0.0
        %991 = vmatpush1.xpose.msra.mxu0 0.0
        %992 = vmatprep.subr.mxu0 0.0
        %993 = vmatpush1.xpose.msra.mxu0 0.0
        %994 = vmatprep.subr.mxu0 0.0
        %995 = vmatpush1.xpose.msra.mxu0 0.0
        %996 = vmatprep.subr.mxu0 0.0
        %997 = vmatpush1.xpose.msra.mxu0 0.0
        %998 = vmatprep.subr.mxu0 0.0
        %999 = vmatpush1.xpose.msra.mxu0 0.0
        %1000 = vmatprep.subr.mxu0 0.0
        %1001 = vmatpush1.xpose.msra.mxu0 0.0
        %1002 = vmatprep.subr.mxu0 0.0
        %1003 = vmatpush1.xpose.msra.mxu0 0.0
        %1004 = vmatprep.subr.mxu0 0.0
        %1005 = vmatpush1.xpose.msra.mxu0 0.0
        %1006 = vmatprep.subr.mxu0 0.0
        %1007 = vmatpush1.xpose.msra.mxu0 0.0
        %1008 = vmatprep.subr.mxu0 0.0
        %1009 = vmatpush1.xpose.msra.mxu0 0.0
        %1010 = vmatprep.subr.mxu0 0.0
        %1011 = vmatpush1.xpose.msra.mxu0 0.0
        %1012 = vmatprep.subr.mxu0 0.0
        %1013 = vmatpush1.xpose.msra.mxu0 0.0
        %1014 = vmatprep.subr.mxu0 0.0
        %1015 = vmatpush1.xpose.msra.mxu0 0.0
        %1016 = vmatprep.subr.mxu0 0.0
        %1017 = vmatpush1.xpose.msra.mxu0 0.0
        %1018 = vmatprep.subr.mxu0 0.0
        %1019 = vmatpush1.xpose.msra.mxu0 0.0
        %1020 = vmatprep.subr.mxu0 0.0
        %1021 = vmatpush1.xpose.msra.mxu0 0.0
        %1022 = vmatprep.subr.mxu0 0.0
        %1023 = vmatpush1.xpose.msra.mxu0 0.0
        %1024 = vmatprep.subr.mxu0 0.0
        %1025 = vmatpush1.xpose.msra.mxu0 0.0
        %1026 = vmatprep.subr.mxu0 0.0
        %1027 = vmatpush1.xpose.msra.mxu0 0.0
        %1028 = vmatprep.subr.mxu0 0.0
        %1029 = vmatpush1.xpose.msra.mxu0 0.0
        %1030 = vmatprep.subr.mxu0 0.0
        %1031 = vmatpush1.xpose.msra.mxu0 0.0
        %1032 = vmatprep.subr.mxu0 0.0
        %1033 = vmatpush1.xpose.msra.mxu0 0.0
        %1034 = vmatprep.subr.mxu0 0.0
        %1035 = vmatpush1.xpose.msra.mxu0 0.0
        %1036 = vmatprep.subr.mxu0 0.0
        %1037 = vmatpush1.xpose.msra.mxu0 0.0
        %1038 = vmatprep.subr.mxu0 0.0
        %1039 = vmatpush1.xpose.msra.mxu0 0.0
        %1040 = vmatprep.mubr.f32.mxu0 0.0
        %1041 = vmatmul.mubr.f32.gmra.mrb[0].mxu0 %v968
        %v1042 = vpop.f32.mrb[0].mxu0
        %v1043 = vadd.f32 0.0, %v1042
        %v1044 = vpop.f32.mrb[0].mxu0
        %1045 = vmatprep.mubr.f32.mxu0 0.0
        %1046 = vmatmul.mubr.f32.gmra.mrb[0].mxu0 %v970
        %v1047 = vpop.f32.mrb[0].mxu0
        %v1048 = vadd.f32 0.0, %v1047
        %v1049 = vpop.f32.mrb[0].mxu0
        %1050 = vdwg.mxu0
        %v1051 = vmul.f32 %v1043, 0.35355338
        %v1052 = vmul.f32 %v1048, 0.35355338
        %v1053 = vsel %vm458, %v1051, -inf
        %1054 = vmax.xlane.f32.xlu0 %v1053
        %v1055 = vpop.xlane.xlu0 %1054
        %v1056 = vsel %vm458, %v1052, -inf
        %1057 = vmax.xlane.f32.xlu0 %v1056
        %v1058 = vpop.xlane.xlu0 %1057
        %v1059 = vsub.f32 %v1051, %v1055
        %v1060 = vsub.f32 %v1052, %v1058
        %v1061 = vmul.f32 %v1059, 1.442695
        %v1062 = vpow.pop %v1061
        %v1063 = vmul.f32 %v1060, 1.442695
        %v1064 = vpow.pop %v1063
        %v1065 = vsel %vm458, %v1062, 0.0
        %1066 = vadd.xlane.f32.xlu0 %v1065
        %v1067 = vpop.xlane.xlu0 %1066
        %v1068 = vsel %vm458, %v1064, 0.0
        %1069 = vadd.xlane.f32.xlu0 %v1068
        %v1070 = vpop.xlane.xlu0 %1069
        %v1071 = vrcp.pop %v1067
        %v1072 = vrcp.pop %v1070
        %v1073 = vmul.f32 %v1062, %v1071
        %v1074 = vmul.f32 %v1064, %v1072
        %1075 = vrot.lane.b32.xlu0 %v358, 48
        %v1076 = vpop.permute.xlu0 %1075
        %1077 = vrot.lane.b32.xlu0 %v363, 48
        %v1078 = vpop.permute.xlu0 %1077
        %v1082 = vsel %vm458, %v1073, 0
        %v1085 = vsel %vm458, %v1074, 0
        %1087 = vmatprep.subr.mxu0 0.0
        %1088 = vmatpush1.msra.mxu0 %v1076
        %1089 = vmatprep.subr.mxu0 0.0
        %1090 = vmatpush1.msra.mxu0 %v1078
        %1091 = vmatprep.subr.mxu0 0.0
        %1092 = vmatpush1.msra.mxu0 0.0
        %1093 = vmatprep.subr.mxu0 0.0
        %1094 = vmatpush1.msra.mxu0 0.0
        %1095 = vmatprep.subr.mxu0 0.0
        %1096 = vmatpush1.msra.mxu0 0.0
        %1097 = vmatprep.subr.mxu0 0.0
        %1098 = vmatpush1.msra.mxu0 0.0
        %1099 = vmatprep.subr.mxu0 0.0
        %1100 = vmatpush1.msra.mxu0 0.0
        %1101 = vmatprep.subr.mxu0 0.0
        %1102 = vmatpush1.msra.mxu0 0.0
        %1103 = vmatprep.subr.mxu0 0.0
        %1104 = vmatpush1.msra.mxu0 0.0
        %1105 = vmatprep.subr.mxu0 0.0
        %1106 = vmatpush1.msra.mxu0 0.0
        %1107 = vmatprep.subr.mxu0 0.0
        %1108 = vmatpush1.msra.mxu0 0.0
        %1109 = vmatprep.subr.mxu0 0.0
        %1110 = vmatpush1.msra.mxu0 0.0
        %1111 = vmatprep.subr.mxu0 0.0
        %1112 = vmatpush1.msra.mxu0 0.0
        %1113 = vmatprep.subr.mxu0 0.0
        %1114 = vmatpush1.msra.mxu0 0.0
        %1115 = vmatprep.subr.mxu0 0.0
        %1116 = vmatpush1.msra.mxu0 0.0
        %1117 = vmatprep.subr.mxu0 0.0
        %1118 = vmatpush1.msra.mxu0 0.0
        %1119 = vmatprep.subr.mxu0 0.0
        %1120 = vmatpush1.msra.mxu0 0.0
        %1121 = vmatprep.subr.mxu0 0.0
        %1122 = vmatpush1.msra.mxu0 0.0
        %1123 = vmatprep.subr.mxu0 0.0
        %1124 = vmatpush1.msra.mxu0 0.0
        %1125 = vmatprep.subr.mxu0 0.0
        %1126 = vmatpush1.msra.mxu0 0.0
        %1127 = vmatprep.subr.mxu0 0.0
        %1128 = vmatpush1.msra.mxu0 0.0
        %1129 = vmatprep.subr.mxu0 0.0
        %1130 = vmatpush1.msra.mxu0 0.0
        %1131 = vmatprep.subr.mxu0 0.0
        %1132 = vmatpush1.msra.mxu0 0.0
        %1133 = vmatprep.subr.mxu0 0.0
        %1134 = vmatpush1.msra.mxu0 0.0
        %1135 = vmatprep.subr.mxu0 0.0
        %1136 = vmatpush1.msra.mxu0 0.0
        %1137 = vmatprep.subr.mxu0 0.0
        %1138 = vmatpush1.msra.mxu0 0.0
        %1139 = vmatprep.subr.mxu0 0.0
        %1140 = vmatpush1.msra.mxu0 0.0
        %1141 = vmatprep.subr.mxu0 0.0
        %1142 = vmatpush1.msra.mxu0 0.0
        %1143 = vmatprep.subr.mxu0 0.0
        %1144 = vmatpush1.msra.mxu0 0.0
        %1145 = vmatprep.subr.mxu0 0.0
        %1146 = vmatpush1.msra.mxu0 0.0
        %1147 = vmatprep.subr.mxu0 0.0
        %1148 = vmatpush1.msra.mxu0 0.0
        %1149 = vmatprep.subr.mxu0 0.0
        %1150 = vmatpush1.msra.mxu0 0.0
        %1151 = vmatprep.mubr.f32.mxu0 0.0
        %1152 = vmatmul.mubr.f32.gmra.mrb[0].mxu0 %v1082
        %v1153 = vpop.f32.mrb[0].mxu0
        %v1154 = vadd.f32 0.0, %v1153
        %v1155 = vpop.f32.mrb[0].mxu0
        %1156 = vmatprep.mubr.f32.mxu0 0.0
        %1157 = vmatmul.mubr.f32.gmra.mrb[0].mxu0 %v1085
        %v1158 = vpop.f32.mrb[0].mxu0
        %v1159 = vadd.f32 0.0, %v1158
        %v1160 = vpop.f32.mrb[0].mxu0
        %1161 = vdwg.mxu0
        %1162 = vrot.lane.b32.xlu0 %v237, 112
        %v1163 = vpop.permute.xlu0 %1162
        %1164 = vrot.lane.b32.xlu0 %v238, 112
        %v1165 = vpop.permute.xlu0 %1164
        %1166 = vrot.lane.b32.xlu0 %v239, 112
        %v1167 = vpop.permute.xlu0 %1166
        %1168 = vrot.lane.b32.xlu0 %v240, 112
        %v1169 = vpop.permute.xlu0 %1168
        %v1171 = vsel %vm372, %v1154, 0
        %v1174 = vsel %vm372, %v1159, 0
        %v1176 = vsel %vm372, %v1163, 0
        %v1178 = vsel %vm372, %v1165, 0
        %v1180 = vsel %vm372, %v1167, 0
        %v1182 = vsel %vm372, %v1169, 0
        %1184 = vmatprep.subr.mxu0 0.0
        %1185 = vmatpush1.xpose.msra.mxu0 %v1176
        %1186 = vmatprep.subr.mxu0 0.0
        %1187 = vmatpush1.xpose.msra.mxu0 %v1178
        %1188 = vmatprep.subr.mxu0 0.0
        %1189 = vmatpush1.xpose.msra.mxu0 %v1180
        %1190 = vmatprep.subr.mxu0 0.0
        %1191 = vmatpush1.xpose.msra.mxu0 %v1182
        %1192 = vmatprep.subr.mxu0 0.0
        %1193 = vmatpush1.xpose.msra.mxu0 0.0
        %1194 = vmatprep.subr.mxu0 0.0
        %1195 = vmatpush1.xpose.msra.mxu0 0.0
        %1196 = vmatprep.subr.mxu0 0.0
        %1197 = vmatpush1.xpose.msra.mxu0 0.0
        %1198 = vmatprep.subr.mxu0 0.0
        %1199 = vmatpush1.xpose.msra.mxu0 0.0
        %1200 = vmatprep.subr.mxu0 0.0
        %1201 = vmatpush1.xpose.msra.mxu0 0.0
        %1202 = vmatprep.subr.mxu0 0.0
        %1203 = vmatpush1.xpose.msra.mxu0 0.0
        %1204 = vmatprep.subr.mxu0 0.0
        %1205 = vmatpush1.xpose.msra.mxu0 0.0
        %1206 = vmatprep.subr.mxu0 0.0
        %1207 = vmatpush1.xpose.msra.mxu0 0.0
        %1208 = vmatprep.subr.mxu0 0.0
        %1209 = vmatpush1.xpose.msra.mxu0 0.0
        %1210 = vmatprep.subr.mxu0 0.0
        %1211 = vmatpush1.xpose.msra.mxu0 0.0
        %1212 = vmatprep.subr.mxu0 0.0
        %1213 = vmatpush1.xpose.msra.mxu0 0.0
        %1214 = vmatprep.subr.mxu0 0.0
        %1215 = vmatpush1.xpose.msra.mxu0 0.0
        %1216 = vmatprep.subr.mxu0 0.0
        %1217 = vmatpush1.xpose.msra.mxu0 0.0
        %1218 = vmatprep.subr.mxu0 0.0
        %1219 = vmatpush1.xpose.msra.mxu0 0.0
        %1220 = vmatprep.subr.mxu0 0.0
        %1221 = vmatpush1.xpose.msra.mxu0 0.0
        %1222 = vmatprep.subr.mxu0 0.0
        %1223 = vmatpush1.xpose.msra.mxu0 0.0
        %1224 = vmatprep.subr.mxu0 0.0
        %1225 = vmatpush1.xpose.msra.mxu0 0.0
        %1226 = vmatprep.subr.mxu0 0.0
        %1227 = vmatpush1.xpose.msra.mxu0 0.0
        %1228 = vmatprep.subr.mxu0 0.0
        %1229 = vmatpush1.xpose.msra.mxu0 0.0
        %1230 = vmatprep.subr.mxu0 0.0
        %1231 = vmatpush1.xpose.msra.mxu0 0.0
        %1232 = vmatprep.subr.mxu0 0.0
        %1233 = vmatpush1.xpose.msra.mxu0 0.0
        %1234 = vmatprep.subr.mxu0 0.0
        %1235 = vmatpush1.xpose.msra.mxu0 0.0
        %1236 = vmatprep.subr.mxu0 0.0
        %1237 = vmatpush1.xpose.msra.mxu0 0.0
        %1238 = vmatprep.subr.mxu0 0.0
        %1239 = vmatpush1.xpose.msra.mxu0 0.0
        %1240 = vmatprep.subr.mxu0 0.0
        %1241 = vmatpush1.xpose.msra.mxu0 0.0
        %1242 = vmatprep.subr.mxu0 0.0
        %1243 = vmatpush1.xpose.msra.mxu0 0.0
        %1244 = vmatprep.subr.mxu0 0.0
        %1245 = vmatpush1.xpose.msra.mxu0 0.0
        %1246 = vmatprep.subr.mxu0 0.0
        %1247 = vmatpush1.xpose.msra.mxu0 0.0
        %1248 = vmatprep.mubr.f32.mxu0 0.0
        %1249 = vmatmul.mubr.f32.gmra.mrb[0].mxu0 %v1171
        %v1250 = vpop.f32.mrb[0].mxu0
        %v1251 = vadd.f32 0.0, %v1250
        %v1252 = vpop.f32.mrb[0].mxu0
        %1253 = vmatprep.mubr.f32.mxu0 0.0
        %1254 = vmatmul.mubr.f32.gmra.mrb[0].mxu0 %v1174
        %v1255 = vpop.f32.mrb[0].mxu0
        %v1256 = vadd.f32 0.0, %v1255
        %v1257 = vpop.f32.mrb[0].mxu0
        %1258 = vdwg.mxu0
        %v1259 = vadd.f32 %v952, %v1251
        %v1260 = vadd.f32 %v957, %v1256
        %1261 = vrot.lane.b32.xlu0 %v358, 104
        %v1262 = vpop.permute.xlu0 %1261
        %1263 = vrot.lane.b32.xlu0 %v363, 104
        %v1264 = vpop.permute.xlu0 %1263
        %1265 = vrot.lane.b32.xlu0 %v358, 72
        %v1266 = vpop.permute.xlu0 %1265
        %1267 = vrot.lane.b32.xlu0 %v363, 72
        %v1268 = vpop.permute.xlu0 %1267
        %v1269 = vsel %vm372, %v1262, 0
        %v1271 = vsel %vm372, %v1264, 0
        %v1273 = vsel %vm372, %v1266, 0
        %v1275 = vsel %vm372, %v1268, 0
        %1277 = vmatprep.subr.mxu0 0.0
        %1278 = vmatpush1.xpose.msra.mxu0 %v1273
        %1279 = vmatprep.subr.mxu0 0.0
        %1280 = vmatpush1.xpose.msra.mxu0 %v1275
        %1281 = vmatprep.subr.mxu0 0.0
        %1282 = vmatpush1.xpose.msra.mxu0 0.0
        %1283 = vmatprep.subr.mxu0 0.0
        %1284 = vmatpush1.xpose.msra.mxu0 0.0
        %1285 = vmatprep.subr.mxu0 0.0
        %1286 = vmatpush1.xpose.msra.mxu0 0.0
        %1287 = vmatprep.subr.mxu0 0.0
        %1288 = vmatpush1.xpose.msra.mxu0 0.0
        %1289 = vmatprep.subr.mxu0 0.0
        %1290 = vmatpush1.xpose.msra.mxu0 0.0
        %1291 = vmatprep.subr.mxu0 0.0
        %1292 = vmatpush1.xpose.msra.mxu0 0.0
        %1293 = vmatprep.subr.mxu0 0.0
        %1294 = vmatpush1.xpose.msra.mxu0 0.0
        %1295 = vmatprep.subr.mxu0 0.0
        %1296 = vmatpush1.xpose.msra.mxu0 0.0
        %1297 = vmatprep.subr.mxu0 0.0
        %1298 = vmatpush1.xpose.msra.mxu0 0.0
        %1299 = vmatprep.subr.mxu0 0.0
        %1300 = vmatpush1.xpose.msra.mxu0 0.0
        %1301 = vmatprep.subr.mxu0 0.0
        %1302 = vmatpush1.xpose.msra.mxu0 0.0
        %1303 = vmatprep.subr.mxu0 0.0
        %1304 = vmatpush1.xpose.msra.mxu0 0.0
        %1305 = vmatprep.subr.mxu0 0.0
        %1306 = vmatpush1.xpose.msra.mxu0 0.0
        %1307 = vmatprep.subr.mxu0 0.0
        %1308 = vmatpush1.xpose.msra.mxu0 0.0
        %1309 = vmatprep.subr.mxu0 0.0
        %1310 = vmatpush1.xpose.msra.mxu0 0.0
        %1311 = vmatprep.subr.mxu0 0.0
        %1312 = vmatpush1.xpose.msra.mxu0 0.0
        %1313 = vmatprep.subr.mxu0 0.0
        %1314 = vmatpush1.xpose.msra.mxu0 0.0
        %1315 = vmatprep.subr.mxu0 0.0
        %1316 = vmatpush1.xpose.msra.mxu0 0.0
        %1317 = vmatprep.subr.mxu0 0.0
        %1318 = vmatpush1.xpose.msra.mxu0 0.0
        %1319 = vmatprep.subr.mxu0 0.0
        %1320 = vmatpush1.xpose.msra.mxu0 0.0
        %1321 = vmatprep.subr.mxu0 0.0
        %1322 = vmatpush1.xpose.msra.mxu0 0.0
        %1323 = vmatprep.subr.mxu0 0.0
        %1324 = vmatpush1.xpose.msra.mxu0 0.0
        %1325 = vmatprep.subr.mxu0 0.0
        %1326 = vmatpush1.xpose.msra.mxu0 0.0
        %1327 = vmatprep.subr.mxu0 0.0
        %1328 = vmatpush1.xpose.msra.mxu0 0.0
        %1329 = vmatprep.subr.mxu0 0.0
        %1330 = vmatpush1.xpose.msra.mxu0 0.0
        %1331 = vmatprep.subr.mxu0 0.0
        %1332 = vmatpush1.xpose.msra.mxu0 0.0
        %1333 = vmatprep.subr.mxu0 0.0
        %1334 = vmatpush1.xpose.msra.mxu0 0.0
        %1335 = vmatprep.subr.mxu0 0.0
        %1336 = vmatpush1.xpose.msra.mxu0 0.0
        %1337 = vmatprep.subr.mxu0 0.0
        %1338 = vmatpush1.xpose.msra.mxu0 0.0
        %1339 = vmatprep.subr.mxu0 0.0
        %1340 = vmatpush1.xpose.msra.mxu0 0.0
        %1341 = vmatprep.mubr.f32.mxu0 0.0
        %1342 = vmatmul.mubr.f32.gmra.mrb[0].mxu0 %v1269
        %v1343 = vpop.f32.mrb[0].mxu0
        %v1344 = vadd.f32 0.0, %v1343
        %v1345 = vpop.f32.mrb[0].mxu0
        %1346 = vmatprep.mubr.f32.mxu0 0.0
        %1347 = vmatmul.mubr.f32.gmra.mrb[0].mxu0 %v1271
        %v1348 = vpop.f32.mrb[0].mxu0
        %v1349 = vadd.f32 0.0, %v1348
        %v1350 = vpop.f32.mrb[0].mxu0
        %1351 = vdwg.mxu0
        %v1352 = vmul.f32 %v1344, 0.35355338
        %v1353 = vmul.f32 %v1349, 0.35355338
        %v1354 = vsel %vm458, %v1352, -inf
        %1355 = vmax.xlane.f32.xlu0 %v1354
        %v1356 = vpop.xlane.xlu0 %1355
        %v1357 = vsel %vm458, %v1353, -inf
        %1358 = vmax.xlane.f32.xlu0 %v1357
        %v1359 = vpop.xlane.xlu0 %1358
        %v1360 = vsub.f32 %v1352, %v1356
        %v1361 = vsub.f32 %v1353, %v1359
        %v1362 = vmul.f32 %v1360, 1.442695
        %v1363 = vpow.pop %v1362
        %v1364 = vmul.f32 %v1361, 1.442695
        %v1365 = vpow.pop %v1364
        %v1366 = vsel %vm458, %v1363, 0.0
        %1367 = vadd.xlane.f32.xlu0 %v1366
        %v1368 = vpop.xlane.xlu0 %1367
        %v1369 = vsel %vm458, %v1365, 0.0
        %1370 = vadd.xlane.f32.xlu0 %v1369
        %v1371 = vpop.xlane.xlu0 %1370
        %v1372 = vrcp.pop %v1368
        %v1373 = vrcp.pop %v1371
        %v1374 = vmul.f32 %v1363, %v1372
        %v1375 = vmul.f32 %v1365, %v1373
        %1376 = vrot.lane.b32.xlu0 %v358, 40
        %v1377 = vpop.permute.xlu0 %1376
        %1378 = vrot.lane.b32.xlu0 %v363, 40
        %v1379 = vpop.permute.xlu0 %1378
        %v1383 = vsel %vm458, %v1374, 0
        %v1386 = vsel %vm458, %v1375, 0
        %1388 = vmatprep.subr.mxu0 0.0
        %1389 = vmatpush1.msra.mxu0 %v1377
        %1390 = vmatprep.subr.mxu0 0.0
        %1391 = vmatpush1.msra.mxu0 %v1379
        %1392 = vmatprep.subr.mxu0 0.0
        %1393 = vmatpush1.msra.mxu0 0.0
        %1394 = vmatprep.subr.mxu0 0.0
        %1395 = vmatpush1.msra.mxu0 0.0
        %1396 = vmatprep.subr.mxu0 0.0
        %1397 = vmatpush1.msra.mxu0 0.0
        %1398 = vmatprep.subr.mxu0 0.0
        %1399 = vmatpush1.msra.mxu0 0.0
        %1400 = vmatprep.subr.mxu0 0.0
        %1401 = vmatpush1.msra.mxu0 0.0
        %1402 = vmatprep.subr.mxu0 0.0
        %1403 = vmatpush1.msra.mxu0 0.0
        %1404 = vmatprep.subr.mxu0 0.0
        %1405 = vmatpush1.msra.mxu0 0.0
        %1406 = vmatprep.subr.mxu0 0.0
        %1407 = vmatpush1.msra.mxu0 0.0
        %1408 = vmatprep.subr.mxu0 0.0
        %1409 = vmatpush1.msra.mxu0 0.0
        %1410 = vmatprep.subr.mxu0 0.0
        %1411 = vmatpush1.msra.mxu0 0.0
        %1412 = vmatprep.subr.mxu0 0.0
        %1413 = vmatpush1.msra.mxu0 0.0
        %1414 = vmatprep.subr.mxu0 0.0
        %1415 = vmatpush1.msra.mxu0 0.0
        %1416 = vmatprep.subr.mxu0 0.0
        %1417 = vmatpush1.msra.mxu0 0.0
        %1418 = vmatprep.subr.mxu0 0.0
        %1419 = vmatpush1.msra.mxu0 0.0
        %1420 = vmatprep.subr.mxu0 0.0
        %1421 = vmatpush1.msra.mxu0 0.0
        %1422 = vmatprep.subr.mxu0 0.0
        %1423 = vmatpush1.msra.mxu0 0.0
        %1424 = vmatprep.subr.mxu0 0.0
        %1425 = vmatpush1.msra.mxu0 0.0
        %1426 = vmatprep.subr.mxu0 0.0
        %1427 = vmatpush1.msra.mxu0 0.0
        %1428 = vmatprep.subr.mxu0 0.0
        %1429 = vmatpush1.msra.mxu0 0.0
        %1430 = vmatprep.subr.mxu0 0.0
        %1431 = vmatpush1.msra.mxu0 0.0
        %1432 = vmatprep.subr.mxu0 0.0
        %1433 = vmatpush1.msra.mxu0 0.0
        %1434 = vmatprep.subr.mxu0 0.0
        %1435 = vmatpush1.msra.mxu0 0.0
        %1436 = vmatprep.subr.mxu0 0.0
        %1437 = vmatpush1.msra.mxu0 0.0
        %1438 = vmatprep.subr.mxu0 0.0
        %1439 = vmatpush1.msra.mxu0 0.0
        %1440 = vmatprep.subr.mxu0 0.0
        %1441 = vmatpush1.msra.mxu0 0.0
        %1442 = vmatprep.subr.mxu0 0.0
        %1443 = vmatpush1.msra.mxu0 0.0
        %1444 = vmatprep.subr.mxu0 0.0
        %1445 = vmatpush1.msra.mxu0 0.0
        %1446 = vmatprep.subr.mxu0 0.0
        %1447 = vmatpush1.msra.mxu0 0.0
        %1448 = vmatprep.subr.mxu0 0.0
        %1449 = vmatpush1.msra.mxu0 0.0
        %1450 = vmatprep.subr.mxu0 0.0
        %1451 = vmatpush1.msra.mxu0 0.0
        %1452 = vmatprep.mubr.f32.mxu0 0.0
        %1453 = vmatmul.mubr.f32.gmra.mrb[0].mxu0 %v1383
        %v1454 = vpop.f32.mrb[0].mxu0
        %v1455 = vadd.f32 0.0, %v1454
        %v1456 = vpop.f32.mrb[0].mxu0
        %1457 = vmatprep.mubr.f32.mxu0 0.0
        %1458 = vmatmul.mubr.f32.gmra.mrb[0].mxu0 %v1386
        %v1459 = vpop.f32.mrb[0].mxu0
        %v1460 = vadd.f32 0.0, %v1459
        %v1461 = vpop.f32.mrb[0].mxu0
        %1462 = vdwg.mxu0
        %1463 = vrot.lane.b32.xlu0 %v237, 104
        %v1464 = vpop.permute.xlu0 %1463
        %1465 = vrot.lane.b32.xlu0 %v238, 104
        %v1466 = vpop.permute.xlu0 %1465
        %1467 = vrot.lane.b32.xlu0 %v239, 104
        %v1468 = vpop.permute.xlu0 %1467
        %1469 = vrot.lane.b32.xlu0 %v240, 104
        %v1470 = vpop.permute.xlu0 %1469
        %v1472 = vsel %vm372, %v1455, 0
        %v1475 = vsel %vm372, %v1460, 0
        %v1477 = vsel %vm372, %v1464, 0
        %v1479 = vsel %vm372, %v1466, 0
        %v1481 = vsel %vm372, %v1468, 0
        %v1483 = vsel %vm372, %v1470, 0
        %1485 = vmatprep.subr.mxu0 0.0
        %1486 = vmatpush1.xpose.msra.mxu0 %v1477
        %1487 = vmatprep.subr.mxu0 0.0
        %1488 = vmatpush1.xpose.msra.mxu0 %v1479
        %1489 = vmatprep.subr.mxu0 0.0
        %1490 = vmatpush1.xpose.msra.mxu0 %v1481
        %1491 = vmatprep.subr.mxu0 0.0
        %1492 = vmatpush1.xpose.msra.mxu0 %v1483
        %1493 = vmatprep.subr.mxu0 0.0
        %1494 = vmatpush1.xpose.msra.mxu0 0.0
        %1495 = vmatprep.subr.mxu0 0.0
        %1496 = vmatpush1.xpose.msra.mxu0 0.0
        %1497 = vmatprep.subr.mxu0 0.0
        %1498 = vmatpush1.xpose.msra.mxu0 0.0
        %1499 = vmatprep.subr.mxu0 0.0
        %1500 = vmatpush1.xpose.msra.mxu0 0.0
        %1501 = vmatprep.subr.mxu0 0.0
        %1502 = vmatpush1.xpose.msra.mxu0 0.0
        %1503 = vmatprep.subr.mxu0 0.0
        %1504 = vmatpush1.xpose.msra.mxu0 0.0
        %1505 = vmatprep.subr.mxu0 0.0
        %1506 = vmatpush1.xpose.msra.mxu0 0.0
        %1507 = vmatprep.subr.mxu0 0.0
        %1508 = vmatpush1.xpose.msra.mxu0 0.0
        %1509 = vmatprep.subr.mxu0 0.0
        %1510 = vmatpush1.xpose.msra.mxu0 0.0
        %1511 = vmatprep.subr.mxu0 0.0
        %1512 = vmatpush1.xpose.msra.mxu0 0.0
        %1513 = vmatprep.subr.mxu0 0.0
        %1514 = vmatpush1.xpose.msra.mxu0 0.0
        %1515 = vmatprep.subr.mxu0 0.0
        %1516 = vmatpush1.xpose.msra.mxu0 0.0
        %1517 = vmatprep.subr.mxu0 0.0
        %1518 = vmatpush1.xpose.msra.mxu0 0.0
        %1519 = vmatprep.subr.mxu0 0.0
        %1520 = vmatpush1.xpose.msra.mxu0 0.0
        %1521 = vmatprep.subr.mxu0 0.0
        %1522 = vmatpush1.xpose.msra.mxu0 0.0
        %1523 = vmatprep.subr.mxu0 0.0
        %1524 = vmatpush1.xpose.msra.mxu0 0.0
        %1525 = vmatprep.subr.mxu0 0.0
        %1526 = vmatpush1.xpose.msra.mxu0 0.0
        %1527 = vmatprep.subr.mxu0 0.0
        %1528 = vmatpush1.xpose.msra.mxu0 0.0
        %1529 = vmatprep.subr.mxu0 0.0
        %1530 = vmatpush1.xpose.msra.mxu0 0.0
        %1531 = vmatprep.subr.mxu0 0.0
        %1532 = vmatpush1.xpose.msra.mxu0 0.0
        %1533 = vmatprep.subr.mxu0 0.0
        %1534 = vmatpush1.xpose.msra.mxu0 0.0
        %1535 = vmatprep.subr.mxu0 0.0
        %1536 = vmatpush1.xpose.msra.mxu0 0.0
        %1537 = vmatprep.subr.mxu0 0.0
        %1538 = vmatpush1.xpose.msra.mxu0 0.0
        %1539 = vmatprep.subr.mxu0 0.0
        %1540 = vmatpush1.xpose.msra.mxu0 0.0
        %1541 = vmatprep.subr.mxu0 0.0
        %1542 = vmatpush1.xpose.msra.mxu0 0.0
        %1543 = vmatprep.subr.mxu0 0.0
        %1544 = vmatpush1.xpose.msra.mxu0 0.0
        %1545 = vmatprep.subr.mxu0 0.0
        %1546 = vmatpush1.xpose.msra.mxu0 0.0
        %1547 = vmatprep.subr.mxu0 0.0
        %1548 = vmatpush1.xpose.msra.mxu0 0.0
        %1549 = vmatprep.mubr.f32.mxu0 0.0
        %1550 = vmatmul.mubr.f32.gmra.mrb[0].mxu0 %v1472
        %v1551 = vpop.f32.mrb[0].mxu0
        %v1552 = vadd.f32 0.0, %v1551
        %v1553 = vpop.f32.mrb[0].mxu0
        %1554 = vmatprep.mubr.f32.mxu0 0.0
        %1555 = vmatmul.mubr.f32.gmra.mrb[0].mxu0 %v1475
        %v1556 = vpop.f32.mrb[0].mxu0
        %v1557 = vadd.f32 0.0, %v1556
        %v1558 = vpop.f32.mrb[0].mxu0
        %1559 = vdwg.mxu0
        %v1560 = vadd.f32 %v1259, %v1552
        %v1561 = vadd.f32 %v1260, %v1557
        %v1562 = vld [vmem:[%s4] sm:$0x1]
        %v1564 = vlaneseq
        %v1565 = vshrl.u32 %v1564, 7
        %v1566 = vsub.s32 0, %v1565
        %v1567 = vrot.slane %v1562, %v1566
        %v1569 = vadd.f32 %v1560, %v1567
        %v1570 = vadd.f32 %v1561, %v1567
        %1571 = vst.msk [vmem:[%s217] sm:$0xff] %vm248, %v1569
        %1572 = vst.msk [vmem:[%s217 + $0x8] sm:$0xff] %vm248, %v1570
        %s1573 = sand.u32 %s137, 1
        %s1574 = scalar_lea.sflag [#allocation3], %s1573
        %s1575 = sand.u32 %s137, 1
        %s1576 = smul.addr %s1575, 16
        %s1577 = scalar_lea.vmem [#allocation2], %s1576
        // Predicated region
        $region41: #{tpu_custom_call.1} parent=39 // pred_check
          %p1578 = pneg %p147
        $region42: #{tpu_custom_call.1} parent=39 // pred_check_branch
          %1580 = sbr.rel (%p1578) target = $region44
        $region43: #{tpu_custom_call.1} parent=39 // pred_region
          %s1582 = ssub.s32 256, 256
          %1583 = vsyncadd %s1574, %s1582
          %s1584 = smul.addr %s19, 2
          %s1585 = smul.addr %s1584, 128
          %s1586 = scalar_lea.hbm %s5, %s1585
          %s1587 = sshll.u32 %s1577, 4
          %s1588 = int_to_ptr.vmem [resolvable:$true] %s1587
          %1593 = dma.vmem_to_hbm [thread:$0]  %s1588, 256, %s1586, %s1574, 128, 128, 8
        $region44: #{tpu_custom_call.1} parent=39 // pred_fallthru
          _
      $region40: #{tpu_custom_call.1} parent=5 // pred_fallthru
        _
      %p1594 = scmp.le.s32.totalorder 2, %s14
      // Predicated region
      $region45: #{tpu_custom_call.1} parent=5 // pred_check
        %p1595 = pneg %p1594
      $region46: #{tpu_custom_call.1} parent=5 // pred_check_branch
        %1597 = sbr.rel (%p1595) target = $region48
      $region47: #{tpu_custom_call.1} parent=5 // pred_region
        %s1598 = ssub.s32 %s14, 2
        // Predicated region
        $region49: #{tpu_custom_call.1} parent=47 // pred_check
          %p1599 = pneg %p153
        $region50: #{tpu_custom_call.1} parent=47 // pred_check_branch
          %1601 = sbr.rel (%p1599) target = $region52
        $region51: #{tpu_custom_call.1} parent=47 // pred_region
          %s1602 = sand.u32 %s138, 1
          %s1603 = scalar_lea.sflag [#allocation3], %s1602
          %s1604 = sand.u32 %s138, 1
          %s1605 = smul.addr %s1604, 16
          %s1606 = scalar_lea.vmem [#allocation2], %s1605
          %1607 = dma.done %s1603, 256
        $region52: #{tpu_custom_call.1} parent=47 // pred_fallthru
          _
      $region48: #{tpu_custom_call.1} parent=5 // pred_fallthru
        _
    $region6: #{tpu_custom_call.1} parent=1 // loop_footer
      %s18 = sadd.s32 1, %s14
    $region7: #{tpu_custom_call.1} parent=1 // loop_footer_branch
      %13 = sbr.rel target = $region3
    $region8: #{tpu_custom_call.1} parent=1 // loop_exit
      _
    %1608 = vsyncpa [#allocation3], 1
    %s1609 = scalar_lea.sflag [#allocation3], 1
    %1610 = vsyncpa %s1609, 1

</llo_original>
